<compile_context>
chip_gen: v5e
topology: v5e:2x2
jax: 0.10.0
libtpu: 0.0.40
codegen_flags: <defaults>
</compile_context>

<pallas_src>
import jax
import jax.numpy as jnp
from jax import lax
from jax.experimental import pallas as pl
from jax.experimental.pallas import tpu as pltpu

NT_PAD = 128      # CRF current-tag axis padded to a full lane width
NT_JPAD = 8       # CRF previous-tag (reduction) axis padding (>= num_tags)
NEG = -1e30       # finite "-inf" for padded CRF entries (avoids inf-inf NaN)


# ----------------------------------------------------------------------------
# Fused kernel: bidirectional LSTM + hidden2tag + CRF Viterbi forward DP.
# Faithful to the PyTorch module: nn.LSTM is batch_first=False, so the
# recurrence runs along axis 0 of the (B, S, E) tensor (T = B = LSTM "time",
# N = S = LSTM "batch"), exactly as the original forward() does.  The CRF
# (batch_first=True) then runs over N with batch T.
# ----------------------------------------------------------------------------
def _bilstm_crf_kernel(x_ref, wih_ref, whh_ref, b_ref, wtag_ref, btag_ref,
                       mask_ref, start_ref, end_ref, trans_ref,
                       final_ref, bp_ref,
                       xp_ref, hsf_ref, hsb_ref, emis_ref):
    T, N, E = x_ref.shape
    G = wih_ref.shape[1]            # 8H: fused gate width (both directions)
    H2 = whh_ref.shape[0]           # 2H: fused per-position hidden width
    H = H2 // 2
    J = trans_ref.shape[0]          # padded previous-tag count (8)
    K = trans_ref.shape[1]          # padded current-tag count (128 lanes)

    # ---- fused input projection: one lane-dense (T*N, E) @ (E, 8H) matmul ---
    x2 = x_ref[...].reshape(T * N, E).astype(jnp.bfloat16)
    xp_ref[...] = (jnp.dot(x2, wih_ref[...].astype(jnp.bfloat16),
                           preferred_element_type=jnp.float32)
                   + b_ref[...]).reshape(T, N, G)

    # ---- fused bidirectional recurrence (fwd at time t, bwd at time T-1-t) --
    whh_bf = whh_ref[...].astype(jnp.bfloat16)                 # hoisted
    lane = lax.broadcasted_iota(jnp.int32, (N, G), 1)          # hoisted
    fwd_lane = (lane % H2) < H                                 # forward gate lanes

    def step(t, carry):
        h_prev, c_prev = carry                                 # (N, 2H) f32 each
        gate_in = jnp.where(fwd_lane, xp_ref[t], xp_ref[T - 1 - t])
        gates = gate_in + jnp.dot(h_prev.astype(jnp.bfloat16), whh_bf,
                                  preferred_element_type=jnp.float32)
        i = jax.nn.sigmoid(gates[:, 0 * H2:1 * H2])            # [i_f | i_b]
        f = jax.nn.sigmoid(gates[:, 1 * H2:2 * H2])            # [f_f | f_b]
        g = jnp.tanh(gates[:, 2 * H2:3 * H2])                  # [g_f | g_b]
        o = jax.nn.sigmoid(gates[:, 3 * H2:4 * H2])            # [o_f | o_b]
        c_new = f * c_prev + i * g
        h_new = o * jnp.tanh(c_new)
        hsf_ref[t] = h_new[:, :H]                              # fwd hidden @ t
        hsb_ref[T - 1 - t] = h_new[:, H:]                      # bwd hidden @ T-1-t
        return h_new, c_new

    h0 = jnp.zeros((N, H2), jnp.float32)
    c0 = jnp.zeros((N, H2), jnp.float32)
    lax.fori_loop(0, T, step, (h0, c0), unroll=True)

    # ---- batched, lane-dense hidden2tag: (T*N, 2H) @ (2H, 128) --------------
    hf2 = hsf_ref[...].reshape(T * N, H).astype(jnp.bfloat16)
    hb2 = hsb_ref[...].reshape(T * N, H).astype(jnp.bfloat16)
    emis_ref[...] = (jnp.dot(hf2, wtag_ref[0:H, :].astype(jnp.bfloat16),
                             preferred_element_type=jnp.float32)
                     + jnp.dot(hb2, wtag_ref[H:H2, :].astype(jnp.bfloat16),
                               preferred_element_type=jnp.float32)
                     + btag_ref[...])       # rows ordered (t, n), t-major

    def emis_at(n):
        # (T, K) emissions at CRF time-step n, gathered with leading-axis loads.
        return jnp.concatenate(
            [emis_ref[pl.ds(b * N + n, 1), :] for b in range(T)], axis=0)

    # ---- CRF Viterbi forward DP (running score carried in registers) --------
    trans = trans_ref[...]                                     # (J, K), hoisted
    j_iota = lax.broadcasted_iota(jnp.int32, (T, J, K), 1)     # hoisted

    score0 = start_ref[...] + emis_at(0)                       # (T, K)
    bp_ref[0] = jnp.zeros((T, K), jnp.int32)                   # slot 0 unused

    def dp(n, score):
        cand = score[:, :J, None] + trans[None, :, :]          # (T, J, K)
        best = jnp.max(cand, axis=1)                           # (T, K)
        hit = cand == best[:, None, :]                         # first-max argmax
        best_idx = jnp.min(jnp.where(hit, j_iota, J), axis=1).astype(jnp.int32)
        nxt = best + emis_at(n)
        valid = mask_ref[n] > 0.5                              # (T, 1)
        bp_ref[n] = best_idx
        return jnp.where(valid, nxt, score)

    score = lax.fori_loop(1, N, dp, score0, unroll=True)
    final_ref[...] = score + end_ref[...]


def bilstm_crf_forward(emb, mask_tm, params):
    B, S, _ = emb.shape
    H = params["whh_fused"].shape[0] // 2
    G = params["wih_fused"].shape[1]
    vmem = pl.BlockSpec(memory_space=pltpu.MemorySpace.VMEM)
    return pl.pallas_call(
        _bilstm_crf_kernel,
        out_shape=(jax.ShapeDtypeStruct((B, NT_PAD), jnp.float32),
                   jax.ShapeDtypeStruct((S, B, NT_PAD), jnp.int32)),
        in_specs=[vmem] * 10,
        out_specs=(vmem, vmem),
        scratch_shapes=[
            pltpu.VMEM((B, S, G), jnp.float32),        # fused gate projections
            pltpu.VMEM((B, S, H), jnp.float32),        # forward hiddens
            pltpu.VMEM((B, S, H), jnp.float32),        # backward hiddens
            pltpu.VMEM((B * S, NT_PAD), jnp.float32),  # emissions (b-major rows)
        ],
    )(emb, params["wih_fused"], params["whh_fused"], params["b_fused"],
      params["wtag_pad"], params["btag_pad"], mask_tm,
      params["crf_start_pad"], params["crf_end_pad"], params["crf_trans_pad"])


# ----------------------------------------------------------------------------
# Glue: Viterbi backtracking (sequential scalar work; plain JAX on host side).
# Returns padded (B, S) int32 tags; positions past the masked length are 0.
# Assumes (like torchcrf) a contiguous prefix mask with mask[:, 0] == 1.
# ----------------------------------------------------------------------------
def viterbi_backtrack(final_score, bp, attention_mask):
    S = bp.shape[0]
    seq_end = attention_mask.astype(jnp.int32).sum(axis=1) - 1    # (B,)

    def one(bp_b, score_b, end_idx):                              # bp_b: (S, K)
        cur0 = jnp.argmax(score_b).astype(jnp.int32)
        tags0 = jnp.zeros((S,), jnp.int32).at[end_idx].set(cur0)

        def body(k, carry):
            tags, cur = carry
            t = end_idx - k
            is_valid = t >= 1
            t_safe = jnp.maximum(t, 1)
            prev_tag = bp_b[t_safe, cur]
            new_cur = jnp.where(is_valid, prev_tag, cur).astype(jnp.int32)
            tags = jnp.where(is_valid, tags.at[t_safe - 1].set(new_cur), tags)
            return tags, new_cur

        tags, _ = lax.fori_loop(0, S - 1, body, (tags0, cur0))
        return tags

    return jax.vmap(one, in_axes=(1, 0, 0))(bp, final_score, seq_end)


# ----------------------------------------------------------------------------
# Parameter construction (deterministic synthetic weights, fused layouts).
# ----------------------------------------------------------------------------
def init_params(key, vocab_size, embedding_dim, hidden_dim, num_tags):
    assert hidden_dim % 2 == 0
    assert num_tags <= NT_JPAD
    H = hidden_dim // 2
    E = embedding_dim
    ks = jax.random.split(key, 12)

    def u(k, shape, scale=0.1):
        return jax.random.uniform(k, shape, jnp.float32, -scale, scale)

    # per-direction logical LSTM weights (already transposed: (in, 4H))
    wih_f = u(ks[1], (E, 4 * H)); whh_f = u(ks[2], (H, 4 * H)); b_f = u(ks[3], (1, 4 * H))
    wih_b = u(ks[4], (E, 4 * H)); whh_b = u(ks[5], (H, 4 * H)); b_b = u(ks[6], (1, 4 * H))

    # fused gate-major-interleaved column order: [i_f i_b | f_f f_b | g_f g_b | o_f o_b]
    def interleave_cols(wf, wb):
        L = wf.shape[0]
        return jnp.stack([wf.reshape(L, 4, H), wb.reshape(L, 4, H)],
                         axis=2).reshape(L, 8 * H)

    wih_fused = interleave_cols(wih_f, wih_b)                      # (E, 8H)
    b_fused = interleave_cols(b_f, b_b)                            # (1, 8H)
    z4 = jnp.zeros((H, 4, H), jnp.float32)
    top = jnp.stack([whh_f.reshape(H, 4, H), z4], axis=2).reshape(H, 8 * H)
    bot = jnp.stack([z4, whh_b.reshape(H, 4, H)], axis=2).reshape(H, 8 * H)
    whh_fused = jnp.concatenate([top, bot], axis=0)                # (2H, 8H)

    wtag = u(ks[7], (hidden_dim, num_tags))                        # hidden2tag.weight.T
    btag = u(ks[8], (1, num_tags))
    start = u(ks[9], (1, num_tags))
    end = u(ks[10], (1, num_tags))
    trans = u(ks[11], (num_tags, num_tags))

    wtag_pad = jnp.zeros((hidden_dim, NT_PAD), jnp.float32).at[:, :num_tags].set(wtag)
    btag_pad = jnp.zeros((1, NT_PAD), jnp.float32).at[:, :num_tags].set(btag)
    start_pad = jnp.full((1, NT_PAD), NEG, jnp.float32).at[:, :num_tags].set(start)
    end_pad = jnp.full((1, NT_PAD), NEG, jnp.float32).at[:, :num_tags].set(end)
    trans_pad = jnp.full((NT_JPAD, NT_PAD), NEG,
                         jnp.float32).at[:num_tags, :num_tags].set(trans)

    return dict(
        emb=u(ks[0], (vocab_size, embedding_dim), 0.5),            # synthetic "BERT"
        wih_fused=wih_fused, whh_fused=whh_fused, b_fused=b_fused,
        wtag_pad=wtag_pad, btag_pad=btag_pad,
        crf_start_pad=start_pad, crf_end_pad=end_pad, crf_trans_pad=trans_pad,
    )


class BiLSTMCRF:
    def __init__(self, hidden_dim, num_tags, vocab_size, embedding_dim, key):
        self.hidden_dim = hidden_dim
        self.num_tags = num_tags
        self.params = init_params(key, vocab_size, embedding_dim,
                                  hidden_dim, num_tags)

    def __call__(self, token_ids, attention_mask, labels=None):
        p = self.params
        # "BERT" embeddings (synthetic lookup), (B, S, E)
        emb = jnp.take(p["emb"], token_ids, axis=0)
        # CRF mask in time-major layout (S, B, 1)
        mask_tm = jnp.transpose(attention_mask.astype(jnp.float32))[:, :, None]
        # fused BiLSTM + hidden2tag + CRF Viterbi forward DP (one pallas_call)
        final_score, bp = bilstm_crf_forward(emb, mask_tm, p)
        # backtracking (scalar glue)
        tags = viterbi_backtrack(final_score, bp, attention_mask)
        if labels is None:
            return tags
        # TODO(synk): CRF log-likelihood loss path not implemented.
        raise NotImplementedError("CRF training loss not implemented")


if __name__ == "__main__":
    B, S = 2, 8
    hidden_dim, num_tags = 32, 5
    vocab_size, embedding_dim = 64, 32

    key = jax.random.PRNGKey(0)
    k_params, k_tok = jax.random.split(key)

    model = BiLSTMCRF(hidden_dim, num_tags, vocab_size, embedding_dim, k_params)

    token_ids = jax.random.randint(k_tok, (B, S), 0, vocab_size, dtype=jnp.int32)
    lengths = jnp.array([S, 5], dtype=jnp.int32)
    attention_mask = (jnp.arange(S)[None, :] < lengths[:, None]).astype(jnp.int32)

    tags = model(token_ids, attention_mask)
    jax.block_until_ready(tags)
    assert tags.shape == (B, S) and tags.dtype == jnp.int32
    assert int(jnp.max(tags)) < num_tags and int(jnp.min(tags)) >= 0
    print("KERNEL_OK")
</pallas_src>

<mosaic_0001>
module attributes {stable_mosaic.version = 11 : i64} {
  func.func @_bilstm_crf_kernel(%arg0: memref<2x8x32xf32, #tpu.memory_space<vmem>>, %arg1: memref<32x128xf32, #tpu.memory_space<vmem>>, %arg2: memref<32x128xf32, #tpu.memory_space<vmem>>, %arg3: memref<1x128xf32, #tpu.memory_space<vmem>>, %arg4: memref<32x128xf32, #tpu.memory_space<vmem>>, %arg5: memref<1x128xf32, #tpu.memory_space<vmem>>, %arg6: memref<8x2x1xf32, #tpu.memory_space<vmem>>, %arg7: memref<1x128xf32, #tpu.memory_space<vmem>>, %arg8: memref<1x128xf32, #tpu.memory_space<vmem>>, %arg9: memref<8x128xf32, #tpu.memory_space<vmem>>, %arg10: memref<2x128xf32, #tpu.memory_space<vmem>>, %arg11: memref<8x2x128xi32, #tpu.memory_space<vmem>>, %arg12: memref<2x8x128xf32, #tpu.memory_space<vmem>>, %arg13: memref<2x8x16xf32, #tpu.memory_space<vmem>>, %arg14: memref<2x8x16xf32, #tpu.memory_space<vmem>>, %arg15: memref<16x128xf32, #tpu.memory_space<vmem>>) attributes {dimension_semantics = [], scalar_prefetch = 0 : i64, scratch_operands = 4 : i64, tpu.core_type = #tpu.core_type<tc>} {
    %c0 = arith.constant 0 : index
    %c0_0 = arith.constant 0 : index
    %c0_1 = arith.constant 0 : index
    %0 = vector.load %arg0[%c0, %c0_0, %c0_1] : memref<2x8x32xf32, #tpu.memory_space<vmem>>, vector<2x8x32xf32>
    %1 = vector.shape_cast %0 : vector<2x8x32xf32> to vector<16x32xf32>
    %2 = arith.truncf %1 : vector<16x32xf32> to vector<16x32xbf16>
    %c0_2 = arith.constant 0 : index
    %c0_3 = arith.constant 0 : index
    %3 = vector.load %arg1[%c0_2, %c0_3] : memref<32x128xf32, #tpu.memory_space<vmem>>, vector<32x128xf32>
    %4 = arith.truncf %3 : vector<32x128xf32> to vector<32x128xbf16>
    %cst = arith.constant dense<0.000000e+00> : vector<16x128xf32>
    %5 = tpu.matmul %2, %4, %cst {dimension_numbers = #tpu.dot_dimension_numbers<[1], [0], [0], [1], [0, 0, 1, 1], [], []>} : vector<16x32xbf16>, vector<32x128xbf16>, vector<16x128xf32> -> vector<16x128xf32>
    %c0_4 = arith.constant 0 : index
    %c0_5 = arith.constant 0 : index
    %6 = vector.load %arg3[%c0_4, %c0_5] : memref<1x128xf32, #tpu.memory_space<vmem>>, vector<1x128xf32>
    %7 = vector.broadcast %6 : vector<1x128xf32> to vector<16x128xf32>
    %8 = arith.addf %5, %7 : vector<16x128xf32>
    %9 = vector.shape_cast %8 : vector<16x128xf32> to vector<2x8x128xf32>
    %c0_6 = arith.constant 0 : index
    %c0_7 = arith.constant 0 : index
    %c0_8 = arith.constant 0 : index
    %10 = vector.load %arg12[%c0_6, %c0_7, %c0_8] : memref<2x8x128xf32, #tpu.memory_space<vmem>>, vector<2x8x128xf32>
    tpu.vector_store %arg12[%c0_6, %c0_7, %c0_8], %9 {strides = array<i32>} : memref<2x8x128xf32, #tpu.memory_space<vmem>>, vector<2x8x128xf32>,
    %c0_9 = arith.constant 0 : index
    %c0_10 = arith.constant 0 : index
    %11 = vector.load %arg2[%c0_9, %c0_10] : memref<32x128xf32, #tpu.memory_space<vmem>>, vector<32x128xf32>
    %12 = arith.truncf %11 : vector<32x128xf32> to vector<32x128xbf16>
    %13 = tpu.iota {dimensions = array<i32: 1>} : vector<8x128xi32>
    %c32_i32 = arith.constant 32 : i32
    %c0_i32 = arith.constant 0 : i32
    %14 = arith.cmpi eq, %c32_i32, %c0_i32 : i32
    %c1_i32 = arith.constant 1 : i32
    %15 = arith.select %14, %c1_i32, %c32_i32 : i32
    %16 = vector.broadcast %15 : i32 to vector<8x128xi32>
    %17 = arith.remsi %13, %16 : vector<8x128xi32>
    %c0_i32_11 = arith.constant 0 : i32
    %18 = vector.broadcast %c0_i32_11 : i32 to vector<8x128xi32>
    %19 = arith.cmpi ne, %17, %18 : vector<8x128xi32>
    %c0_i32_12 = arith.constant 0 : i32
    %20 = vector.broadcast %c0_i32_12 : i32 to vector<8x128xi32>
    %21 = arith.cmpi slt, %17, %20 : vector<8x128xi32>
    %c0_i32_13 = arith.constant 0 : i32
    %22 = arith.cmpi slt, %15, %c0_i32_13 : i32
    %23 = vector.broadcast %22 : i1 to vector<8x128xi1>
    %24 = vector.broadcast %23 : vector<8x128xi1> to vector<8x128xi1>
    %25 = arith.xori %21, %24 : vector<8x128xi1>
    %26 = arith.andi %25, %19 : vector<8x128xi1>
    %27 = vector.broadcast %15 : i32 to vector<8x128xi32>
    %28 = arith.addi %17, %27 : vector<8x128xi32>
    %29 = arith.select %26, %28, %17 : vector<8x128xi1>, vector<8x128xi32>
    %c16_i32 = arith.constant 16 : i32
    %30 = vector.broadcast %c16_i32 : i32 to vector<8x128xi32>
    %31 = arith.cmpi slt, %29, %30 : vector<8x128xi32>
    %cst_14 = arith.constant 0.000000e+00 : f32
    %32 = vector.broadcast %cst_14 : f32 to vector<8x32xf32>
    %cst_15 = arith.constant 0.000000e+00 : f32
    %33 = vector.broadcast %cst_15 : f32 to vector<8x32xf32>
    %c0_i32_16 = arith.constant 0 : i32
    %34 = arith.index_cast %c0_i32_16 : i32 to index
    %c0_17 = arith.constant 0 : index
    %c0_18 = arith.constant 0 : index
    %35 = vector.load %arg12[%34, %c0_17, %c0_18] : memref<2x8x128xf32, #tpu.memory_space<vmem>>, vector<1x8x128xf32>
    %36 = vector.shape_cast %35 : vector<1x8x128xf32> to vector<8x128xf32>
    %c1_i32_19 = arith.constant 1 : i32
    %37 = arith.subi %c1_i32_19, %c0_i32_16 : i32
    %38 = arith.index_cast %37 : i32 to index
    %c0_20 = arith.constant 0 : index
    %c0_21 = arith.constant 0 : index
    %39 = vector.load %arg12[%38, %c0_20, %c0_21] : memref<2x8x128xf32, #tpu.memory_space<vmem>>, vector<1x8x128xf32>
    %40 = vector.shape_cast %39 : vector<1x8x128xf32> to vector<8x128xf32>
    %41 = arith.select %31, %36, %40 : vector<8x128xi1>, vector<8x128xf32>
    %42 = arith.truncf %32 : vector<8x32xf32> to vector<8x32xbf16>
    %cst_22 = arith.constant dense<0.000000e+00> : vector<8x128xf32>
    %43 = tpu.matmul %42, %12, %cst_22 {dimension_numbers = #tpu.dot_dimension_numbers<[1], [0], [0], [1], [0, 0, 1, 1], [], []>} : vector<8x32xbf16>, vector<32x128xbf16>, vector<8x128xf32> -> vector<8x128xf32>
    %44 = arith.addf %41, %43 : vector<8x128xf32>
    %45 = vector.extract_strided_slice %44 {offsets = [0, 0], sizes = [8, 32], strides = [1, 1]} : vector<8x128xf32> to vector<8x32xf32>
    %46 = arith.negf %45 : vector<8x32xf32>
    %47 = math.exp %46 : vector<8x32xf32>
    %cst_23 = arith.constant 1.000000e+00 : f32
    %48 = vector.broadcast %cst_23 : f32 to vector<8x32xf32>
    %49 = arith.addf %48, %47 : vector<8x32xf32>
    %50 = arith.divf %48, %49 : vector<8x32xf32>
    %51 = vector.extract_strided_slice %44 {offsets = [0, 32], sizes = [8, 32], strides = [1, 1]} : vector<8x128xf32> to vector<8x32xf32>
    %52 = arith.negf %51 : vector<8x32xf32>
    %53 = math.exp %52 : vector<8x32xf32>
    %cst_24 = arith.constant 1.000000e+00 : f32
    %54 = vector.broadcast %cst_24 : f32 to vector<8x32xf32>
    %55 = arith.addf %54, %53 : vector<8x32xf32>
    %56 = arith.divf %54, %55 : vector<8x32xf32>
    %57 = vector.extract_strided_slice %44 {offsets = [0, 64], sizes = [8, 32], strides = [1, 1]} : vector<8x128xf32> to vector<8x32xf32>
    %58 = math.tanh %57 : vector<8x32xf32>
    %59 = vector.extract_strided_slice %44 {offsets = [0, 96], sizes = [8, 32], strides = [1, 1]} : vector<8x128xf32> to vector<8x32xf32>
    %60 = arith.negf %59 : vector<8x32xf32>
    %61 = math.exp %60 : vector<8x32xf32>
    %cst_25 = arith.constant 1.000000e+00 : f32
    %62 = vector.broadcast %cst_25 : f32 to vector<8x32xf32>
    %63 = arith.addf %62, %61 : vector<8x32xf32>
    %64 = arith.divf %62, %63 : vector<8x32xf32>
    %65 = arith.mulf %56, %33 : vector<8x32xf32>
    %66 = arith.mulf %50, %58 : vector<8x32xf32>
    %67 = arith.addf %65, %66 : vector<8x32xf32>
    %68 = math.tanh %67 : vector<8x32xf32>
    %69 = arith.mulf %64, %68 : vector<8x32xf32>
    %70 = vector.extract_strided_slice %69 {offsets = [0, 0], sizes = [8, 16], strides = [1, 1]} : vector<8x32xf32> to vector<8x16xf32>
    %71 = arith.index_cast %c0_i32_16 : i32 to index
    %c0_26 = arith.constant 0 : index
    %c0_27 = arith.constant 0 : index
    %72 = vector.load %arg13[%71, %c0_26, %c0_27] : memref<2x8x16xf32, #tpu.memory_space<vmem>>, vector<1x8x16xf32>
    %73 = vector.shape_cast %72 : vector<1x8x16xf32> to vector<8x16xf32>
    %74 = vector.shape_cast %70 : vector<8x16xf32> to vector<1x8x16xf32>
    tpu.vector_store %arg13[%71, %c0_26, %c0_27], %74 {strides = array<i32>} : memref<2x8x16xf32, #tpu.memory_space<vmem>>, vector<1x8x16xf32>,
    %75 = vector.extract_strided_slice %69 {offsets = [0, 16], sizes = [8, 16], strides = [1, 1]} : vector<8x32xf32> to vector<8x16xf32>
    %c1_i32_28 = arith.constant 1 : i32
    %76 = arith.subi %c1_i32_28, %c0_i32_16 : i32
    %77 = arith.index_cast %76 : i32 to index
    %c0_29 = arith.constant 0 : index
    %c0_30 = arith.constant 0 : index
    %78 = vector.load %arg14[%77, %c0_29, %c0_30] : memref<2x8x16xf32, #tpu.memory_space<vmem>>, vector<1x8x16xf32>
    %79 = vector.shape_cast %78 : vector<1x8x16xf32> to vector<8x16xf32>
    %80 = vector.shape_cast %75 : vector<8x16xf32> to vector<1x8x16xf32>
    tpu.vector_store %arg14[%77, %c0_29, %c0_30], %80 {strides = array<i32>} : memref<2x8x16xf32, #tpu.memory_space<vmem>>, vector<1x8x16xf32>,
    %c1_i32_31 = arith.constant 1 : i32
    %81 = arith.index_cast %c1_i32_31 : i32 to index
    %c0_32 = arith.constant 0 : index
    %c0_33 = arith.constant 0 : index
    %82 = vector.load %arg12[%81, %c0_32, %c0_33] : memref<2x8x128xf32, #tpu.memory_space<vmem>>, vector<1x8x128xf32>
    %83 = vector.shape_cast %82 : vector<1x8x128xf32> to vector<8x128xf32>
    %c1_i32_34 = arith.constant 1 : i32
    %84 = arith.subi %c1_i32_34, %c1_i32_31 : i32
    %85 = arith.index_cast %84 : i32 to index
    %c0_35 = arith.constant 0 : index
    %c0_36 = arith.constant 0 : index
    %86 = vector.load %arg12[%85, %c0_35, %c0_36] : memref<2x8x128xf32, #tpu.memory_space<vmem>>, vector<1x8x128xf32>
    %87 = vector.shape_cast %86 : vector<1x8x128xf32> to vector<8x128xf32>
    %88 = arith.select %31, %83, %87 : vector<8x128xi1>, vector<8x128xf32>
    %89 = arith.truncf %69 : vector<8x32xf32> to vector<8x32xbf16>
    %cst_37 = arith.constant dense<0.000000e+00> : vector<8x128xf32>
    %90 = tpu.matmul %89, %12, %cst_37 {dimension_numbers = #tpu.dot_dimension_numbers<[1], [0], [0], [1], [0, 0, 1, 1], [], []>} : vector<8x32xbf16>, vector<32x128xbf16>, vector<8x128xf32> -> vector<8x128xf32>
    %91 = arith.addf %88, %90 : vector<8x128xf32>
    %92 = vector.extract_strided_slice %91 {offsets = [0, 0], sizes = [8, 32], strides = [1, 1]} : vector<8x128xf32> to vector<8x32xf32>
    %93 = arith.negf %92 : vector<8x32xf32>
    %94 = math.exp %93 : vector<8x32xf32>
    %cst_38 = arith.constant 1.000000e+00 : f32
    %95 = vector.broadcast %cst_38 : f32 to vector<8x32xf32>
    %96 = arith.addf %95, %94 : vector<8x32xf32>
    %97 = arith.divf %95, %96 : vector<8x32xf32>
    %98 = vector.extract_strided_slice %91 {offsets = [0, 32], sizes = [8, 32], strides = [1, 1]} : vector<8x128xf32> to vector<8x32xf32>
    %99 = arith.negf %98 : vector<8x32xf32>
    %100 = math.exp %99 : vector<8x32xf32>
    %cst_39 = arith.constant 1.000000e+00 : f32
    %101 = vector.broadcast %cst_39 : f32 to vector<8x32xf32>
    %102 = arith.addf %101, %100 : vector<8x32xf32>
    %103 = arith.divf %101, %102 : vector<8x32xf32>
    %104 = vector.extract_strided_slice %91 {offsets = [0, 64], sizes = [8, 32], strides = [1, 1]} : vector<8x128xf32> to vector<8x32xf32>
    %105 = math.tanh %104 : vector<8x32xf32>
    %106 = vector.extract_strided_slice %91 {offsets = [0, 96], sizes = [8, 32], strides = [1, 1]} : vector<8x128xf32> to vector<8x32xf32>
    %107 = arith.negf %106 : vector<8x32xf32>
    %108 = math.exp %107 : vector<8x32xf32>
    %cst_40 = arith.constant 1.000000e+00 : f32
    %109 = vector.broadcast %cst_40 : f32 to vector<8x32xf32>
    %110 = arith.addf %109, %108 : vector<8x32xf32>
    %111 = arith.divf %109, %110 : vector<8x32xf32>
    %112 = arith.mulf %103, %67 : vector<8x32xf32>
    %113 = arith.mulf %97, %105 : vector<8x32xf32>
    %114 = arith.addf %112, %113 : vector<8x32xf32>
    %115 = math.tanh %114 : vector<8x32xf32>
    %116 = arith.mulf %111, %115 : vector<8x32xf32>
    %117 = vector.extract_strided_slice %116 {offsets = [0, 0], sizes = [8, 16], strides = [1, 1]} : vector<8x32xf32> to vector<8x16xf32>
    %118 = arith.index_cast %c1_i32_31 : i32 to index
    %c0_41 = arith.constant 0 : index
    %c0_42 = arith.constant 0 : index
    %119 = vector.load %arg13[%118, %c0_41, %c0_42] : memref<2x8x16xf32, #tpu.memory_space<vmem>>, vector<1x8x16xf32>
    %120 = vector.shape_cast %119 : vector<1x8x16xf32> to vector<8x16xf32>
    %121 = vector.shape_cast %117 : vector<8x16xf32> to vector<1x8x16xf32>
    tpu.vector_store %arg13[%118, %c0_41, %c0_42], %121 {strides = array<i32>} : memref<2x8x16xf32, #tpu.memory_space<vmem>>, vector<1x8x16xf32>,
    %122 = vector.extract_strided_slice %116 {offsets = [0, 16], sizes = [8, 16], strides = [1, 1]} : vector<8x32xf32> to vector<8x16xf32>
    %c1_i32_43 = arith.constant 1 : i32
    %123 = arith.subi %c1_i32_43, %c1_i32_31 : i32
    %124 = arith.index_cast %123 : i32 to index
    %c0_44 = arith.constant 0 : index
    %c0_45 = arith.constant 0 : index
    %125 = vector.load %arg14[%124, %c0_44, %c0_45] : memref<2x8x16xf32, #tpu.memory_space<vmem>>, vector<1x8x16xf32>
    %126 = vector.shape_cast %125 : vector<1x8x16xf32> to vector<8x16xf32>
    %127 = vector.shape_cast %122 : vector<8x16xf32> to vector<1x8x16xf32>
    tpu.vector_store %arg14[%124, %c0_44, %c0_45], %127 {strides = array<i32>} : memref<2x8x16xf32, #tpu.memory_space<vmem>>, vector<1x8x16xf32>,
    %c2_i32 = arith.constant 2 : i32
    %c0_46 = arith.constant 0 : index
    %c0_47 = arith.constant 0 : index
    %c0_48 = arith.constant 0 : index
    %128 = vector.load %arg13[%c0_46, %c0_47, %c0_48] : memref<2x8x16xf32, #tpu.memory_space<vmem>>, vector<2x8x16xf32>
    %129 = vector.shape_cast %128 : vector<2x8x16xf32> to vector<16x16xf32>
    %130 = arith.truncf %129 : vector<16x16xf32> to vector<16x16xbf16>
    %c0_49 = arith.constant 0 : index
    %c0_50 = arith.constant 0 : index
    %c0_51 = arith.constant 0 : index
    %131 = vector.load %arg14[%c0_49, %c0_50, %c0_51] : memref<2x8x16xf32, #tpu.memory_space<vmem>>, vector<2x8x16xf32>
    %132 = vector.shape_cast %131 : vector<2x8x16xf32> to vector<16x16xf32>
    %133 = arith.truncf %132 : vector<16x16xf32> to vector<16x16xbf16>
    %c0_52 = arith.constant 0 : index
    %c0_53 = arith.constant 0 : index
    %134 = vector.load %arg4[%c0_52, %c0_53] : memref<32x128xf32, #tpu.memory_space<vmem>>, vector<16x128xf32>
    %135 = arith.truncf %134 : vector<16x128xf32> to vector<16x128xbf16>
    %cst_54 = arith.constant dense<0.000000e+00> : vector<16x128xf32>
    %136 = tpu.matmul %130, %135, %cst_54 {dimension_numbers = #tpu.dot_dimension_numbers<[1], [0], [0], [1], [0, 0, 1, 1], [], []>} : vector<16x16xbf16>, vector<16x128xbf16>, vector<16x128xf32> -> vector<16x128xf32>
    %c16 = arith.constant 16 : index
    %c0_55 = arith.constant 0 : index
    %137 = vector.load %arg4[%c16, %c0_55] : memref<32x128xf32, #tpu.memory_space<vmem>>, vector<16x128xf32>
    %138 = arith.truncf %137 : vector<16x128xf32> to vector<16x128xbf16>
    %cst_56 = arith.constant dense<0.000000e+00> : vector<16x128xf32>
    %139 = tpu.matmul %133, %138, %cst_56 {dimension_numbers = #tpu.dot_dimension_numbers<[1], [0], [0], [1], [0, 0, 1, 1], [], []>} : vector<16x16xbf16>, vector<16x128xbf16>, vector<16x128xf32> -> vector<16x128xf32>
    %140 = arith.addf %136, %139 : vector<16x128xf32>
    %c0_57 = arith.constant 0 : index
    %c0_58 = arith.constant 0 : index
    %141 = vector.load %arg5[%c0_57, %c0_58] : memref<1x128xf32, #tpu.memory_space<vmem>>, vector<1x128xf32>
    %142 = vector.broadcast %141 : vector<1x128xf32> to vector<16x128xf32>
    %143 = arith.addf %140, %142 : vector<16x128xf32>
    %c0_59 = arith.constant 0 : index
    %c0_60 = arith.constant 0 : index
    %144 = vector.load %arg15[%c0_59, %c0_60] : memref<16x128xf32, #tpu.memory_space<vmem>>, vector<16x128xf32>
    tpu.vector_store %arg15[%c0_59, %c0_60], %143 {strides = array<i32>} : memref<16x128xf32, #tpu.memory_space<vmem>>, vector<16x128xf32>,
    %c0_61 = arith.constant 0 : index
    %c0_62 = arith.constant 0 : index
    %145 = vector.load %arg9[%c0_61, %c0_62] : memref<8x128xf32, #tpu.memory_space<vmem>>, vector<8x128xf32>
    %146 = tpu.iota {dimensions = array<i32: 1>} : vector<2x8x128xi32>
    %c0_63 = arith.constant 0 : index
    %c0_64 = arith.constant 0 : index
    %147 = vector.load %arg7[%c0_63, %c0_64] : memref<1x128xf32, #tpu.memory_space<vmem>>, vector<1x128xf32>
    %c0_65 = arith.constant 0 : index
    %c0_66 = arith.constant 0 : index
    %148 = vector.load %arg15[%c0_65, %c0_66] : memref<16x128xf32, #tpu.memory_space<vmem>>, vector<1x128xf32>
    %c8 = arith.constant 8 : index
    %c0_67 = arith.constant 0 : index
    %149 = vector.load %arg15[%c8, %c0_67] : memref<16x128xf32, #tpu.memory_space<vmem>>, vector<1x128xf32>
    %150 = tpu.concatenate %148, %149 in 0 : vector<1x128xf32>, vector<1x128xf32> -> vector<2x128xf32>
    %151 = vector.broadcast %147 : vector<1x128xf32> to vector<2x128xf32>
    %152 = arith.addf %151, %150 : vector<2x128xf32>
    %c0_i32_68 = arith.constant 0 : i32
    %153 = vector.broadcast %c0_i32_68 : i32 to vector<2x128xi32>
    %c0_69 = arith.constant 0 : index
    %c0_70 = arith.constant 0 : index
    %c0_71 = arith.constant 0 : index
    %154 = vector.load %arg11[%c0_69, %c0_70, %c0_71] : memref<8x2x128xi32, #tpu.memory_space<vmem>>, vector<1x2x128xi32>
    %155 = vector.shape_cast %154 : vector<1x2x128xi32> to vector<2x128xi32>
    %156 = vector.shape_cast %153 : vector<2x128xi32> to vector<1x2x128xi32>
    tpu.vector_store %arg11[%c0_69, %c0_70, %c0_71], %156 {strides = array<i32>} : memref<8x2x128xi32, #tpu.memory_space<vmem>>, vector<1x2x128xi32>,
    %c1_i32_72 = arith.constant 1 : i32
    %157 = vector.extract_strided_slice %152 {offsets = [0, 0], sizes = [2, 8], strides = [1, 1]} : vector<2x128xf32> to vector<2x8xf32>
    %158 = vector.shape_cast %157 : vector<2x8xf32> to vector<2x8x1xf32>
    %159 = vector.shape_cast %145 : vector<8x128xf32> to vector<1x8x128xf32>
    %160 = vector.broadcast %158 : vector<2x8x1xf32> to vector<2x8x128xf32>
    %161 = vector.broadcast %159 : vector<1x8x128xf32> to vector<2x8x128xf32>
    %162 = arith.addf %160, %161 : vector<2x8x128xf32>
    %cst_73 = arith.constant dense<0xFF800000> : vector<2x128xf32>
    %163 = vector.multi_reduction <maximumf>, %162, %cst_73 [1] : vector<2x8x128xf32> to vector<2x128xf32>
    %164 = vector.shape_cast %163 : vector<2x128xf32> to vector<2x1x128xf32>
    %165 = vector.broadcast %164 : vector<2x1x128xf32> to vector<2x8x128xf32>
    %166 = arith.cmpf oeq, %162, %165 : vector<2x8x128xf32>
    %c8_i32 = arith.constant 8 : i32
    %167 = vector.broadcast %c8_i32 : i32 to vector<2x8x128xi32>
    %168 = arith.select %166, %146, %167 : vector<2x8x128xi1>, vector<2x8x128xi32>
    %cst_74 = arith.constant dense<2147483647> : vector<2x128xi32>
    %169 = vector.multi_reduction <minsi>, %168, %cst_74 [1] : vector<2x8x128xi32> to vector<2x128xi32>
    %c0_i32_75 = arith.constant 0 : i32
    %170 = arith.addi %c0_i32_75, %c1_i32_72 : i32
    %171 = arith.index_cast %170 : i32 to index
    %c0_76 = arith.constant 0 : index
    %172 = vector.load %arg15[%171, %c0_76] : memref<16x128xf32, #tpu.memory_space<vmem>>, vector<1x128xf32>
    %c8_i32_77 = arith.constant 8 : i32
    %173 = arith.addi %c8_i32_77, %c1_i32_72 : i32
    %174 = arith.index_cast %173 : i32 to index
    %c0_78 = arith.constant 0 : index
    %175 = vector.load %arg15[%174, %c0_78] : memref<16x128xf32, #tpu.memory_space<vmem>>, vector<1x128xf32>
    %176 = tpu.concatenate %172, %175 in 0 : vector<1x128xf32>, vector<1x128xf32> -> vector<2x128xf32>
    %177 = arith.addf %163, %176 : vector<2x128xf32>
    %178 = arith.index_cast %c1_i32_72 : i32 to index
    %c0_79 = arith.constant 0 : index
    %c0_80 = arith.constant 0 : index
    %179 = vector.load %arg6[%178, %c0_79, %c0_80] : memref<8x2x1xf32, #tpu.memory_space<vmem>>, vector<1x2x1xf32>
    %180 = vector.shape_cast %179 : vector<1x2x1xf32> to vector<2x1xf32>
    %cst_81 = arith.constant 5.000000e-01 : f32
    %181 = vector.broadcast %cst_81 : f32 to vector<2x1xf32>
    %182 = arith.cmpf ogt, %180, %181 : vector<2x1xf32>
    %183 = arith.index_cast %c1_i32_72 : i32 to index
    %c0_82 = arith.constant 0 : index
    %c0_83 = arith.constant 0 : index
    %184 = vector.load %arg11[%183, %c0_82, %c0_83] : memref<8x2x128xi32, #tpu.memory_space<vmem>>, vector<1x2x128xi32>
    %185 = vector.shape_cast %184 : vector<1x2x128xi32> to vector<2x128xi32>
    %186 = vector.shape_cast %169 : vector<2x128xi32> to vector<1x2x128xi32>
    tpu.vector_store %arg11[%183, %c0_82, %c0_83], %186 {strides = array<i32>} : memref<8x2x128xi32, #tpu.memory_space<vmem>>, vector<1x2x128xi32>,
    %187 = vector.shape_cast %182 : vector<2x1xi1> to vector<2x1xi1>
    %188 = vector.broadcast %187 : vector<2x1xi1> to vector<2x128xi1>
    %189 = arith.select %188, %177, %152 : vector<2x128xi1>, vector<2x128xf32>
    %c2_i32_84 = arith.constant 2 : i32
    %190 = vector.extract_strided_slice %189 {offsets = [0, 0], sizes = [2, 8], strides = [1, 1]} : vector<2x128xf32> to vector<2x8xf32>
    %191 = vector.shape_cast %190 : vector<2x8xf32> to vector<2x8x1xf32>
    %192 = vector.shape_cast %145 : vector<8x128xf32> to vector<1x8x128xf32>
    %193 = vector.broadcast %191 : vector<2x8x1xf32> to vector<2x8x128xf32>
    %194 = vector.broadcast %192 : vector<1x8x128xf32> to vector<2x8x128xf32>
    %195 = arith.addf %193, %194 : vector<2x8x128xf32>
    %cst_85 = arith.constant dense<0xFF800000> : vector<2x128xf32>
    %196 = vector.multi_reduction <maximumf>, %195, %cst_85 [1] : vector<2x8x128xf32> to vector<2x128xf32>
    %197 = vector.shape_cast %196 : vector<2x128xf32> to vector<2x1x128xf32>
    %198 = vector.broadcast %197 : vector<2x1x128xf32> to vector<2x8x128xf32>
    %199 = arith.cmpf oeq, %195, %198 : vector<2x8x128xf32>
    %c8_i32_86 = arith.constant 8 : i32
    %200 = vector.broadcast %c8_i32_86 : i32 to vector<2x8x128xi32>
    %201 = arith.select %199, %146, %200 : vector<2x8x128xi1>, vector<2x8x128xi32>
    %cst_87 = arith.constant dense<2147483647> : vector<2x128xi32>
    %202 = vector.multi_reduction <minsi>, %201, %cst_87 [1] : vector<2x8x128xi32> to vector<2x128xi32>
    %c0_i32_88 = arith.constant 0 : i32
    %203 = arith.addi %c0_i32_88, %c2_i32_84 : i32
    %204 = arith.index_cast %203 : i32 to index
    %c0_89 = arith.constant 0 : index
    %205 = vector.load %arg15[%204, %c0_89] : memref<16x128xf32, #tpu.memory_space<vmem>>, vector<1x128xf32>
    %c8_i32_90 = arith.constant 8 : i32
    %206 = arith.addi %c8_i32_90, %c2_i32_84 : i32
    %207 = arith.index_cast %206 : i32 to index
    %c0_91 = arith.constant 0 : index
    %208 = vector.load %arg15[%207, %c0_91] : memref<16x128xf32, #tpu.memory_space<vmem>>, vector<1x128xf32>
    %209 = tpu.concatenate %205, %208 in 0 : vector<1x128xf32>, vector<1x128xf32> -> vector<2x128xf32>
    %210 = arith.addf %196, %209 : vector<2x128xf32>
    %211 = arith.index_cast %c2_i32_84 : i32 to index
    %c0_92 = arith.constant 0 : index
    %c0_93 = arith.constant 0 : index
    %212 = vector.load %arg6[%211, %c0_92, %c0_93] : memref<8x2x1xf32, #tpu.memory_space<vmem>>, vector<1x2x1xf32>
    %213 = vector.shape_cast %212 : vector<1x2x1xf32> to vector<2x1xf32>
    %cst_94 = arith.constant 5.000000e-01 : f32
    %214 = vector.broadcast %cst_94 : f32 to vector<2x1xf32>
    %215 = arith.cmpf ogt, %213, %214 : vector<2x1xf32>
    %216 = arith.index_cast %c2_i32_84 : i32 to index
    %c0_95 = arith.constant 0 : index
    %c0_96 = arith.constant 0 : index
    %217 = vector.load %arg11[%216, %c0_95, %c0_96] : memref<8x2x128xi32, #tpu.memory_space<vmem>>, vector<1x2x128xi32>
    %218 = vector.shape_cast %217 : vector<1x2x128xi32> to vector<2x128xi32>
    %219 = vector.shape_cast %202 : vector<2x128xi32> to vector<1x2x128xi32>
    tpu.vector_store %arg11[%216, %c0_95, %c0_96], %219 {strides = array<i32>} : memref<8x2x128xi32, #tpu.memory_space<vmem>>, vector<1x2x128xi32>,
    %220 = vector.shape_cast %215 : vector<2x1xi1> to vector<2x1xi1>
    %221 = vector.broadcast %220 : vector<2x1xi1> to vector<2x128xi1>
    %222 = arith.select %221, %210, %189 : vector<2x128xi1>, vector<2x128xf32>
    %c3_i32 = arith.constant 3 : i32
    %223 = vector.extract_strided_slice %222 {offsets = [0, 0], sizes = [2, 8], strides = [1, 1]} : vector<2x128xf32> to vector<2x8xf32>
    %224 = vector.shape_cast %223 : vector<2x8xf32> to vector<2x8x1xf32>
    %225 = vector.shape_cast %145 : vector<8x128xf32> to vector<1x8x128xf32>
    %226 = vector.broadcast %224 : vector<2x8x1xf32> to vector<2x8x128xf32>
    %227 = vector.broadcast %225 : vector<1x8x128xf32> to vector<2x8x128xf32>
    %228 = arith.addf %226, %227 : vector<2x8x128xf32>
    %cst_97 = arith.constant dense<0xFF800000> : vector<2x128xf32>
    %229 = vector.multi_reduction <maximumf>, %228, %cst_97 [1] : vector<2x8x128xf32> to vector<2x128xf32>
    %230 = vector.shape_cast %229 : vector<2x128xf32> to vector<2x1x128xf32>
    %231 = vector.broadcast %230 : vector<2x1x128xf32> to vector<2x8x128xf32>
    %232 = arith.cmpf oeq, %228, %231 : vector<2x8x128xf32>
    %c8_i32_98 = arith.constant 8 : i32
    %233 = vector.broadcast %c8_i32_98 : i32 to vector<2x8x128xi32>
    %234 = arith.select %232, %146, %233 : vector<2x8x128xi1>, vector<2x8x128xi32>
    %cst_99 = arith.constant dense<2147483647> : vector<2x128xi32>
    %235 = vector.multi_reduction <minsi>, %234, %cst_99 [1] : vector<2x8x128xi32> to vector<2x128xi32>
    %c0_i32_100 = arith.constant 0 : i32
    %236 = arith.addi %c0_i32_100, %c3_i32 : i32
    %237 = arith.index_cast %236 : i32 to index
    %c0_101 = arith.constant 0 : index
    %238 = vector.load %arg15[%237, %c0_101] : memref<16x128xf32, #tpu.memory_space<vmem>>, vector<1x128xf32>
    %c8_i32_102 = arith.constant 8 : i32
    %239 = arith.addi %c8_i32_102, %c3_i32 : i32
    %240 = arith.index_cast %239 : i32 to index
    %c0_103 = arith.constant 0 : index
    %241 = vector.load %arg15[%240, %c0_103] : memref<16x128xf32, #tpu.memory_space<vmem>>, vector<1x128xf32>
    %242 = tpu.concatenate %238, %241 in 0 : vector<1x128xf32>, vector<1x128xf32> -> vector<2x128xf32>
    %243 = arith.addf %229, %242 : vector<2x128xf32>
    %244 = arith.index_cast %c3_i32 : i32 to index
    %c0_104 = arith.constant 0 : index
    %c0_105 = arith.constant 0 : index
    %245 = vector.load %arg6[%244, %c0_104, %c0_105] : memref<8x2x1xf32, #tpu.memory_space<vmem>>, vector<1x2x1xf32>
    %246 = vector.shape_cast %245 : vector<1x2x1xf32> to vector<2x1xf32>
    %cst_106 = arith.constant 5.000000e-01 : f32
    %247 = vector.broadcast %cst_106 : f32 to vector<2x1xf32>
    %248 = arith.cmpf ogt, %246, %247 : vector<2x1xf32>
    %249 = arith.index_cast %c3_i32 : i32 to index
    %c0_107 = arith.constant 0 : index
    %c0_108 = arith.constant 0 : index
    %250 = vector.load %arg11[%249, %c0_107, %c0_108] : memref<8x2x128xi32, #tpu.memory_space<vmem>>, vector<1x2x128xi32>
    %251 = vector.shape_cast %250 : vector<1x2x128xi32> to vector<2x128xi32>
    %252 = vector.shape_cast %235 : vector<2x128xi32> to vector<1x2x128xi32>
    tpu.vector_store %arg11[%249, %c0_107, %c0_108], %252 {strides = array<i32>} : memref<8x2x128xi32, #tpu.memory_space<vmem>>, vector<1x2x128xi32>,
    %253 = vector.shape_cast %248 : vector<2x1xi1> to vector<2x1xi1>
    %254 = vector.broadcast %253 : vector<2x1xi1> to vector<2x128xi1>
    %255 = arith.select %254, %243, %222 : vector<2x128xi1>, vector<2x128xf32>
    %c4_i32 = arith.constant 4 : i32
    %256 = vector.extract_strided_slice %255 {offsets = [0, 0], sizes = [2, 8], strides = [1, 1]} : vector<2x128xf32> to vector<2x8xf32>
    %257 = vector.shape_cast %256 : vector<2x8xf32> to vector<2x8x1xf32>
    %258 = vector.shape_cast %145 : vector<8x128xf32> to vector<1x8x128xf32>
    %259 = vector.broadcast %257 : vector<2x8x1xf32> to vector<2x8x128xf32>
    %260 = vector.broadcast %258 : vector<1x8x128xf32> to vector<2x8x128xf32>
    %261 = arith.addf %259, %260 : vector<2x8x128xf32>
    %cst_109 = arith.constant dense<0xFF800000> : vector<2x128xf32>
    %262 = vector.multi_reduction <maximumf>, %261, %cst_109 [1] : vector<2x8x128xf32> to vector<2x128xf32>
    %263 = vector.shape_cast %262 : vector<2x128xf32> to vector<2x1x128xf32>
    %264 = vector.broadcast %263 : vector<2x1x128xf32> to vector<2x8x128xf32>
    %265 = arith.cmpf oeq, %261, %264 : vector<2x8x128xf32>
    %c8_i32_110 = arith.constant 8 : i32
    %266 = vector.broadcast %c8_i32_110 : i32 to vector<2x8x128xi32>
    %267 = arith.select %265, %146, %266 : vector<2x8x128xi1>, vector<2x8x128xi32>
    %cst_111 = arith.constant dense<2147483647> : vector<2x128xi32>
    %268 = vector.multi_reduction <minsi>, %267, %cst_111 [1] : vector<2x8x128xi32> to vector<2x128xi32>
    %c0_i32_112 = arith.constant 0 : i32
    %269 = arith.addi %c0_i32_112, %c4_i32 : i32
    %270 = arith.index_cast %269 : i32 to index
    %c0_113 = arith.constant 0 : index
    %271 = vector.load %arg15[%270, %c0_113] : memref<16x128xf32, #tpu.memory_space<vmem>>, vector<1x128xf32>
    %c8_i32_114 = arith.constant 8 : i32
    %272 = arith.addi %c8_i32_114, %c4_i32 : i32
    %273 = arith.index_cast %272 : i32 to index
    %c0_115 = arith.constant 0 : index
    %274 = vector.load %arg15[%273, %c0_115] : memref<16x128xf32, #tpu.memory_space<vmem>>, vector<1x128xf32>
    %275 = tpu.concatenate %271, %274 in 0 : vector<1x128xf32>, vector<1x128xf32> -> vector<2x128xf32>
    %276 = arith.addf %262, %275 : vector<2x128xf32>
    %277 = arith.index_cast %c4_i32 : i32 to index
    %c0_116 = arith.constant 0 : index
    %c0_117 = arith.constant 0 : index
    %278 = vector.load %arg6[%277, %c0_116, %c0_117] : memref<8x2x1xf32, #tpu.memory_space<vmem>>, vector<1x2x1xf32>
    %279 = vector.shape_cast %278 : vector<1x2x1xf32> to vector<2x1xf32>
    %cst_118 = arith.constant 5.000000e-01 : f32
    %280 = vector.broadcast %cst_118 : f32 to vector<2x1xf32>
    %281 = arith.cmpf ogt, %279, %280 : vector<2x1xf32>
    %282 = arith.index_cast %c4_i32 : i32 to index
    %c0_119 = arith.constant 0 : index
    %c0_120 = arith.constant 0 : index
    %283 = vector.load %arg11[%282, %c0_119, %c0_120] : memref<8x2x128xi32, #tpu.memory_space<vmem>>, vector<1x2x128xi32>
    %284 = vector.shape_cast %283 : vector<1x2x128xi32> to vector<2x128xi32>
    %285 = vector.shape_cast %268 : vector<2x128xi32> to vector<1x2x128xi32>
    tpu.vector_store %arg11[%282, %c0_119, %c0_120], %285 {strides = array<i32>} : memref<8x2x128xi32, #tpu.memory_space<vmem>>, vector<1x2x128xi32>,
    %286 = vector.shape_cast %281 : vector<2x1xi1> to vector<2x1xi1>
    %287 = vector.broadcast %286 : vector<2x1xi1> to vector<2x128xi1>
    %288 = arith.select %287, %276, %255 : vector<2x128xi1>, vector<2x128xf32>
    %c5_i32 = arith.constant 5 : i32
    %289 = vector.extract_strided_slice %288 {offsets = [0, 0], sizes = [2, 8], strides = [1, 1]} : vector<2x128xf32> to vector<2x8xf32>
    %290 = vector.shape_cast %289 : vector<2x8xf32> to vector<2x8x1xf32>
    %291 = vector.shape_cast %145 : vector<8x128xf32> to vector<1x8x128xf32>
    %292 = vector.broadcast %290 : vector<2x8x1xf32> to vector<2x8x128xf32>
    %293 = vector.broadcast %291 : vector<1x8x128xf32> to vector<2x8x128xf32>
    %294 = arith.addf %292, %293 : vector<2x8x128xf32>
    %cst_121 = arith.constant dense<0xFF800000> : vector<2x128xf32>
    %295 = vector.multi_reduction <maximumf>, %294, %cst_121 [1] : vector<2x8x128xf32> to vector<2x128xf32>
    %296 = vector.shape_cast %295 : vector<2x128xf32> to vector<2x1x128xf32>
    %297 = vector.broadcast %296 : vector<2x1x128xf32> to vector<2x8x128xf32>
    %298 = arith.cmpf oeq, %294, %297 : vector<2x8x128xf32>
    %c8_i32_122 = arith.constant 8 : i32
    %299 = vector.broadcast %c8_i32_122 : i32 to vector<2x8x128xi32>
    %300 = arith.select %298, %146, %299 : vector<2x8x128xi1>, vector<2x8x128xi32>
    %cst_123 = arith.constant dense<2147483647> : vector<2x128xi32>
    %301 = vector.multi_reduction <minsi>, %300, %cst_123 [1] : vector<2x8x128xi32> to vector<2x128xi32>
    %c0_i32_124 = arith.constant 0 : i32
    %302 = arith.addi %c0_i32_124, %c5_i32 : i32
    %303 = arith.index_cast %302 : i32 to index
    %c0_125 = arith.constant 0 : index
    %304 = vector.load %arg15[%303, %c0_125] : memref<16x128xf32, #tpu.memory_space<vmem>>, vector<1x128xf32>
    %c8_i32_126 = arith.constant 8 : i32
    %305 = arith.addi %c8_i32_126, %c5_i32 : i32
    %306 = arith.index_cast %305 : i32 to index
    %c0_127 = arith.constant 0 : index
    %307 = vector.load %arg15[%306, %c0_127] : memref<16x128xf32, #tpu.memory_space<vmem>>, vector<1x128xf32>
    %308 = tpu.concatenate %304, %307 in 0 : vector<1x128xf32>, vector<1x128xf32> -> vector<2x128xf32>
    %309 = arith.addf %295, %308 : vector<2x128xf32>
    %310 = arith.index_cast %c5_i32 : i32 to index
    %c0_128 = arith.constant 0 : index
    %c0_129 = arith.constant 0 : index
    %311 = vector.load %arg6[%310, %c0_128, %c0_129] : memref<8x2x1xf32, #tpu.memory_space<vmem>>, vector<1x2x1xf32>
    %312 = vector.shape_cast %311 : vector<1x2x1xf32> to vector<2x1xf32>
    %cst_130 = arith.constant 5.000000e-01 : f32
    %313 = vector.broadcast %cst_130 : f32 to vector<2x1xf32>
    %314 = arith.cmpf ogt, %312, %313 : vector<2x1xf32>
    %315 = arith.index_cast %c5_i32 : i32 to index
    %c0_131 = arith.constant 0 : index
    %c0_132 = arith.constant 0 : index
    %316 = vector.load %arg11[%315, %c0_131, %c0_132] : memref<8x2x128xi32, #tpu.memory_space<vmem>>, vector<1x2x128xi32>
    %317 = vector.shape_cast %316 : vector<1x2x128xi32> to vector<2x128xi32>
    %318 = vector.shape_cast %301 : vector<2x128xi32> to vector<1x2x128xi32>
    tpu.vector_store %arg11[%315, %c0_131, %c0_132], %318 {strides = array<i32>} : memref<8x2x128xi32, #tpu.memory_space<vmem>>, vector<1x2x128xi32>,
    %319 = vector.shape_cast %314 : vector<2x1xi1> to vector<2x1xi1>
    %320 = vector.broadcast %319 : vector<2x1xi1> to vector<2x128xi1>
    %321 = arith.select %320, %309, %288 : vector<2x128xi1>, vector<2x128xf32>
    %c6_i32 = arith.constant 6 : i32
    %322 = vector.extract_strided_slice %321 {offsets = [0, 0], sizes = [2, 8], strides = [1, 1]} : vector<2x128xf32> to vector<2x8xf32>
    %323 = vector.shape_cast %322 : vector<2x8xf32> to vector<2x8x1xf32>
    %324 = vector.shape_cast %145 : vector<8x128xf32> to vector<1x8x128xf32>
    %325 = vector.broadcast %323 : vector<2x8x1xf32> to vector<2x8x128xf32>
    %326 = vector.broadcast %324 : vector<1x8x128xf32> to vector<2x8x128xf32>
    %327 = arith.addf %325, %326 : vector<2x8x128xf32>
    %cst_133 = arith.constant dense<0xFF800000> : vector<2x128xf32>
    %328 = vector.multi_reduction <maximumf>, %327, %cst_133 [1] : vector<2x8x128xf32> to vector<2x128xf32>
    %329 = vector.shape_cast %328 : vector<2x128xf32> to vector<2x1x128xf32>
    %330 = vector.broadcast %329 : vector<2x1x128xf32> to vector<2x8x128xf32>
    %331 = arith.cmpf oeq, %327, %330 : vector<2x8x128xf32>
    %c8_i32_134 = arith.constant 8 : i32
    %332 = vector.broadcast %c8_i32_134 : i32 to vector<2x8x128xi32>
    %333 = arith.select %331, %146, %332 : vector<2x8x128xi1>, vector<2x8x128xi32>
    %cst_135 = arith.constant dense<2147483647> : vector<2x128xi32>
    %334 = vector.multi_reduction <minsi>, %333, %cst_135 [1] : vector<2x8x128xi32> to vector<2x128xi32>
    %c0_i32_136 = arith.constant 0 : i32
    %335 = arith.addi %c0_i32_136, %c6_i32 : i32
    %336 = arith.index_cast %335 : i32 to index
    %c0_137 = arith.constant 0 : index
    %337 = vector.load %arg15[%336, %c0_137] : memref<16x128xf32, #tpu.memory_space<vmem>>, vector<1x128xf32>
    %c8_i32_138 = arith.constant 8 : i32
    %338 = arith.addi %c8_i32_138, %c6_i32 : i32
    %339 = arith.index_cast %338 : i32 to index
    %c0_139 = arith.constant 0 : index
    %340 = vector.load %arg15[%339, %c0_139] : memref<16x128xf32, #tpu.memory_space<vmem>>, vector<1x128xf32>
    %341 = tpu.concatenate %337, %340 in 0 : vector<1x128xf32>, vector<1x128xf32> -> vector<2x128xf32>
    %342 = arith.addf %328, %341 : vector<2x128xf32>
    %343 = arith.index_cast %c6_i32 : i32 to index
    %c0_140 = arith.constant 0 : index
    %c0_141 = arith.constant 0 : index
    %344 = vector.load %arg6[%343, %c0_140, %c0_141] : memref<8x2x1xf32, #tpu.memory_space<vmem>>, vector<1x2x1xf32>
    %345 = vector.shape_cast %344 : vector<1x2x1xf32> to vector<2x1xf32>
    %cst_142 = arith.constant 5.000000e-01 : f32
    %346 = vector.broadcast %cst_142 : f32 to vector<2x1xf32>
    %347 = arith.cmpf ogt, %345, %346 : vector<2x1xf32>
    %348 = arith.index_cast %c6_i32 : i32 to index
    %c0_143 = arith.constant 0 : index
    %c0_144 = arith.constant 0 : index
    %349 = vector.load %arg11[%348, %c0_143, %c0_144] : memref<8x2x128xi32, #tpu.memory_space<vmem>>, vector<1x2x128xi32>
    %350 = vector.shape_cast %349 : vector<1x2x128xi32> to vector<2x128xi32>
    %351 = vector.shape_cast %334 : vector<2x128xi32> to vector<1x2x128xi32>
    tpu.vector_store %arg11[%348, %c0_143, %c0_144], %351 {strides = array<i32>} : memref<8x2x128xi32, #tpu.memory_space<vmem>>, vector<1x2x128xi32>,
    %352 = vector.shape_cast %347 : vector<2x1xi1> to vector<2x1xi1>
    %353 = vector.broadcast %352 : vector<2x1xi1> to vector<2x128xi1>
    %354 = arith.select %353, %342, %321 : vector<2x128xi1>, vector<2x128xf32>
    %c7_i32 = arith.constant 7 : i32
    %355 = vector.extract_strided_slice %354 {offsets = [0, 0], sizes = [2, 8], strides = [1, 1]} : vector<2x128xf32> to vector<2x8xf32>
    %356 = vector.shape_cast %355 : vector<2x8xf32> to vector<2x8x1xf32>
    %357 = vector.shape_cast %145 : vector<8x128xf32> to vector<1x8x128xf32>
    %358 = vector.broadcast %356 : vector<2x8x1xf32> to vector<2x8x128xf32>
    %359 = vector.broadcast %357 : vector<1x8x128xf32> to vector<2x8x128xf32>
    %360 = arith.addf %358, %359 : vector<2x8x128xf32>
    %cst_145 = arith.constant dense<0xFF800000> : vector<2x128xf32>
    %361 = vector.multi_reduction <maximumf>, %360, %cst_145 [1] : vector<2x8x128xf32> to vector<2x128xf32>
    %362 = vector.shape_cast %361 : vector<2x128xf32> to vector<2x1x128xf32>
    %363 = vector.broadcast %362 : vector<2x1x128xf32> to vector<2x8x128xf32>
    %364 = arith.cmpf oeq, %360, %363 : vector<2x8x128xf32>
    %c8_i32_146 = arith.constant 8 : i32
    %365 = vector.broadcast %c8_i32_146 : i32 to vector<2x8x128xi32>
    %366 = arith.select %364, %146, %365 : vector<2x8x128xi1>, vector<2x8x128xi32>
    %cst_147 = arith.constant dense<2147483647> : vector<2x128xi32>
    %367 = vector.multi_reduction <minsi>, %366, %cst_147 [1] : vector<2x8x128xi32> to vector<2x128xi32>
    %c0_i32_148 = arith.constant 0 : i32
    %368 = arith.addi %c0_i32_148, %c7_i32 : i32
    %369 = arith.index_cast %368 : i32 to index
    %c0_149 = arith.constant 0 : index
    %370 = vector.load %arg15[%369, %c0_149] : memref<16x128xf32, #tpu.memory_space<vmem>>, vector<1x128xf32>
    %c8_i32_150 = arith.constant 8 : i32
    %371 = arith.addi %c8_i32_150, %c7_i32 : i32
    %372 = arith.index_cast %371 : i32 to index
    %c0_151 = arith.constant 0 : index
    %373 = vector.load %arg15[%372, %c0_151] : memref<16x128xf32, #tpu.memory_space<vmem>>, vector<1x128xf32>
    %374 = tpu.concatenate %370, %373 in 0 : vector<1x128xf32>, vector<1x128xf32> -> vector<2x128xf32>
    %375 = arith.addf %361, %374 : vector<2x128xf32>
    %376 = arith.index_cast %c7_i32 : i32 to index
    %c0_152 = arith.constant 0 : index
    %c0_153 = arith.constant 0 : index
    %377 = vector.load %arg6[%376, %c0_152, %c0_153] : memref<8x2x1xf32, #tpu.memory_space<vmem>>, vector<1x2x1xf32>
    %378 = vector.shape_cast %377 : vector<1x2x1xf32> to vector<2x1xf32>
    %cst_154 = arith.constant 5.000000e-01 : f32
    %379 = vector.broadcast %cst_154 : f32 to vector<2x1xf32>
    %380 = arith.cmpf ogt, %378, %379 : vector<2x1xf32>
    %381 = arith.index_cast %c7_i32 : i32 to index
    %c0_155 = arith.constant 0 : index
    %c0_156 = arith.constant 0 : index
    %382 = vector.load %arg11[%381, %c0_155, %c0_156] : memref<8x2x128xi32, #tpu.memory_space<vmem>>, vector<1x2x128xi32>
    %383 = vector.shape_cast %382 : vector<1x2x128xi32> to vector<2x128xi32>
    %384 = vector.shape_cast %367 : vector<2x128xi32> to vector<1x2x128xi32>
    tpu.vector_store %arg11[%381, %c0_155, %c0_156], %384 {strides = array<i32>} : memref<8x2x128xi32, #tpu.memory_space<vmem>>, vector<1x2x128xi32>,
    %385 = vector.shape_cast %380 : vector<2x1xi1> to vector<2x1xi1>
    %386 = vector.broadcast %385 : vector<2x1xi1> to vector<2x128xi1>
    %387 = arith.select %386, %375, %354 : vector<2x128xi1>, vector<2x128xf32>
    %c7_i32_157 = arith.constant 7 : i32
    %c0_158 = arith.constant 0 : index
    %c0_159 = arith.constant 0 : index
    %388 = vector.load %arg8[%c0_158, %c0_159] : memref<1x128xf32, #tpu.memory_space<vmem>>, vector<1x128xf32>
    %389 = vector.broadcast %388 : vector<1x128xf32> to vector<2x128xf32>
    %390 = arith.addf %387, %389 : vector<2x128xf32>
    %c0_160 = arith.constant 0 : index
    %c0_161 = arith.constant 0 : index
    %391 = vector.load %arg10[%c0_160, %c0_161] : memref<2x128xf32, #tpu.memory_space<vmem>>, vector<2x128xf32>
    tpu.vector_store %arg10[%c0_160, %c0_161], %390 {strides = array<i32>} : memref<2x128xf32, #tpu.memory_space<vmem>>, vector<2x128xf32>,
    return
  }
}

</mosaic_0001>

<llo_original>
// kernel: tpu_custom_call.1
$region0: #{tpu_custom_call.1}
  #allocation0 [shape = 'u32[]', space=smem, size = 0x4, offset = 0x4, fixed_abs, tag = 'smem constant byte address 0x4 - core index']
  #allocation1 [shape = 'u32[72,128]{1,0:T(1,128)}', space=vmem, size = 0x9000, scoped, tag = 'internal scratch']
  #allocation2 [shape = 'f32[2,8,128]{2,1,0:T(8,128)}', space=vmem, size = 0x2000, scoped, tag = 'scratch operand']
  #allocation3 [shape = 'f32[2,8,16]{2,1,0:T(8,128)}', space=vmem, size = 0x2000, scoped, tag = 'scratch operand']
  #allocation4 [shape = 'f32[2,8,16]{2,1,0:T(8,128)}', space=vmem, size = 0x2000, scoped, tag = 'scratch operand']
  #allocation5 [shape = 'f32[16,128]{1,0:T(8,128)}', space=vmem, size = 0x2000, scoped, tag = 'scratch operand']
  %s0 = inlined_call_operand.vmem [shape: f32[2,8,32], index: 0, kind: input, shape index: {}]
  %s1 = inlined_call_operand.hbm [shape: f32[32,128], index: 1, kind: input, shape index: {}]
  %s2 = inlined_call_operand.hbm [shape: f32[32,128], index: 2, kind: input, shape index: {}]
  %s3 = inlined_call_operand.vmem [shape: f32[1,128], index: 3, kind: input, shape index: {}]
  %s4 = inlined_call_operand.hbm [shape: f32[32,128], index: 4, kind: input, shape index: {}]
  %s5 = inlined_call_operand.vmem [shape: f32[1,128], index: 5, kind: input, shape index: {}]
  %s6 = inlined_call_operand.vmem [shape: f32[8,2,1], index: 6, kind: input, shape index: {}]
  %s7 = inlined_call_operand.vmem [shape: f32[1,128], index: 7, kind: input, shape index: {}]
  %s8 = inlined_call_operand.vmem [shape: f32[1,128], index: 8, kind: input, shape index: {}]
  %s9 = inlined_call_operand.hbm [shape: f32[8,128], index: 9, kind: input, shape index: {}]
  %s10 = inlined_call_operand.hbm [shape: f32[2,128], index: 10, kind: output, shape index: {0}]
  %s11 = inlined_call_operand.hbm [shape: s32[8,2,128], index: 11, kind: output, shape index: {1}]
  %12 = xla_tuple %s10, %s11
  %s13 = sld [smem:[#allocation0]]
  $region74: #{tpu_custom_call.1} parent=0
    _
  %s15 = ssub.s32 1, %s13
  %s16 = scalar_select 0, %s15, %s13
  $region1: #{tpu_custom_call.1} parent=0
    #allocation6 [shape = 'u8[16384]{0}', space=vmem, size = 0x4000, scoped, tag = 'input window, operand 1, single buffered']
    #allocation7 [shape = 's32[1]{0}', space=sflag, size = 0x4, scoped, tag = 'scoped memory for tpu_custom_call.1']
    #allocation8 [shape = 's32[1]{0}', space=sflag, size = 0x4, scoped, tag = 'scoped memory for tpu_custom_call.1']
    #allocation9 [shape = 'u8[16384]{0}', space=vmem, size = 0x4000, scoped, tag = 'input window, operand 2, single buffered']
    #allocation10 [shape = 's32[1]{0}', space=sflag, size = 0x4, scoped, tag = 'scoped memory for tpu_custom_call.1']
    #allocation11 [shape = 'u8[16384]{0}', space=vmem, size = 0x4000, scoped, tag = 'input window, operand 4, single buffered']
    #allocation12 [shape = 'u8[4096]{0}', space=vmem, size = 0x1000, scoped, tag = 'input window, operand 9, single buffered']
    #allocation13 [shape = 's32[1]{0}', space=sflag, size = 0x4, scoped, tag = 'scoped memory for tpu_custom_call.1']
    #allocation14 [shape = 'u8[1024]{0}', space=vmem, size = 0x400, scoped, tag = 'output window, operand 0, single buffered']
    #allocation15 [shape = 'u8[8192]{0}', space=vmem, size = 0x2000, scoped, tag = 'output window, operand 1, single buffered']
    #allocation16 [shape = 's32[1]{0}', space=sflag, size = 0x4, scoped, tag = 'scoped memory for tpu_custom_call.1']
    %17 = vsyncpa [#allocation7], 0
    %18 = vsyncpa [#allocation10], 0
    %19 = vsyncpa [#allocation13], 0
    %20 = vsyncpa [#allocation8], 0
    %21 = vsyncpa [#allocation16], 0
    // Predicated region
    $region2: #{tpu_custom_call.1} parent=1 // pred_check
      _
    $region3: #{tpu_custom_call.1} parent=1 // pred_check_branch
      %23 = sbr.rel (0) target = $region5
    $region4: #{tpu_custom_call.1} parent=1 // pred_region
      _
    $region5: #{tpu_custom_call.1} parent=1 // pred_fallthru
      _
    // Predicated region
    $region6: #{tpu_custom_call.1} parent=1 // pred_check
      _
    $region7: #{tpu_custom_call.1} parent=1 // pred_check_branch
      %25 = sbr.rel (0) target = $region9
    $region8: #{tpu_custom_call.1} parent=1 // pred_region
      %27 = vsyncadd [#allocation7], 0
      %s28 = sshll.u32 %s1, 4
      %s29 = int_to_ptr.hbm [resolvable:$true] %s28
      %s30 = sshll.u32 [#allocation6], 4
      %s31 = int_to_ptr.vmem [resolvable:$true] %s30
      %36 = dma.hbm_to_vmem [thread:$0]  %s29, 512, %s31, [#allocation7], 128, 128, 8
    $region9: #{tpu_custom_call.1} parent=1 // pred_fallthru
      _
    // Predicated region
    $region10: #{tpu_custom_call.1} parent=1 // pred_check
      _
    $region11: #{tpu_custom_call.1} parent=1 // pred_check_branch
      %38 = sbr.rel (0) target = $region13
    $region12: #{tpu_custom_call.1} parent=1 // pred_region
      %40 = vsyncadd [#allocation10], 0
      %s41 = sshll.u32 %s2, 4
      %s42 = int_to_ptr.hbm [resolvable:$true] %s41
      %s43 = sshll.u32 [#allocation9], 4
      %s44 = int_to_ptr.vmem [resolvable:$true] %s43
      %49 = dma.hbm_to_vmem [thread:$0]  %s42, 512, %s44, [#allocation10], 128, 128, 8
    $region13: #{tpu_custom_call.1} parent=1 // pred_fallthru
      _
    // Predicated region
    $region14: #{tpu_custom_call.1} parent=1 // pred_check
      _
    $region15: #{tpu_custom_call.1} parent=1 // pred_check_branch
      %51 = sbr.rel (0) target = $region17
    $region16: #{tpu_custom_call.1} parent=1 // pred_region
      _
    $region17: #{tpu_custom_call.1} parent=1 // pred_fallthru
      _
    // Predicated region
    $region18: #{tpu_custom_call.1} parent=1 // pred_check
      _
    $region19: #{tpu_custom_call.1} parent=1 // pred_check_branch
      %53 = sbr.rel (0) target = $region21
    $region20: #{tpu_custom_call.1} parent=1 // pred_region
      %55 = vsyncadd [#allocation10], 0
      %s56 = sshll.u32 %s4, 4
      %s57 = int_to_ptr.hbm [resolvable:$true] %s56
      %s58 = sshll.u32 [#allocation11], 4
      %s59 = int_to_ptr.vmem [resolvable:$true] %s58
      %64 = dma.hbm_to_vmem [thread:$0]  %s57, 512, %s59, [#allocation10], 128, 128, 8
    $region21: #{tpu_custom_call.1} parent=1 // pred_fallthru
      _
    // Predicated region
    $region22: #{tpu_custom_call.1} parent=1 // pred_check
      _
    $region23: #{tpu_custom_call.1} parent=1 // pred_check_branch
      %66 = sbr.rel (0) target = $region25
    $region24: #{tpu_custom_call.1} parent=1 // pred_region
      _
    $region25: #{tpu_custom_call.1} parent=1 // pred_fallthru
      _
    // Predicated region
    $region26: #{tpu_custom_call.1} parent=1 // pred_check
      _
    $region27: #{tpu_custom_call.1} parent=1 // pred_check_branch
      %68 = sbr.rel (0) target = $region29
    $region28: #{tpu_custom_call.1} parent=1 // pred_region
      _
    $region29: #{tpu_custom_call.1} parent=1 // pred_fallthru
      _
    // Predicated region
    $region30: #{tpu_custom_call.1} parent=1 // pred_check
      _
    $region31: #{tpu_custom_call.1} parent=1 // pred_check_branch
      %70 = sbr.rel (0) target = $region33
    $region32: #{tpu_custom_call.1} parent=1 // pred_region
      _
    $region33: #{tpu_custom_call.1} parent=1 // pred_fallthru
      _
    // Predicated region
    $region34: #{tpu_custom_call.1} parent=1 // pred_check
      _
    $region35: #{tpu_custom_call.1} parent=1 // pred_check_branch
      %72 = sbr.rel (0) target = $region37
    $region36: #{tpu_custom_call.1} parent=1 // pred_region
      _
    $region37: #{tpu_custom_call.1} parent=1 // pred_fallthru
      _
    // Predicated region
    $region38: #{tpu_custom_call.1} parent=1 // pred_check
      _
    $region39: #{tpu_custom_call.1} parent=1 // pred_check_branch
      %74 = sbr.rel (0) target = $region41
    $region40: #{tpu_custom_call.1} parent=1 // pred_region
      %76 = vsyncadd [#allocation13], 0
      %s78 = sshll.u32 %s9, 4
      %s79 = int_to_ptr.hbm [resolvable:$true] %s78
      %s80 = sshll.u32 [#allocation12], 4
      %s81 = int_to_ptr.vmem [resolvable:$true] %s80
      %83 = dma.hbm_to_vmem [thread:$0]  %s79, 128, %s81, [#allocation13]
    $region41: #{tpu_custom_call.1} parent=1 // pred_fallthru
      _
    // Predicated region
    $region42: #{tpu_custom_call.1} parent=1 // pred_check
      _
    $region43: #{tpu_custom_call.1} parent=1 // pred_check_branch
      %85 = sbr.rel (0) target = $region45
    $region44: #{tpu_custom_call.1} parent=1 // pred_region
      %87 = dma.done [#allocation7], 512
    $region45: #{tpu_custom_call.1} parent=1 // pred_fallthru
      _
    // Predicated region
    $region46: #{tpu_custom_call.1} parent=1 // pred_check
      _
    $region47: #{tpu_custom_call.1} parent=1 // pred_check_branch
      %89 = sbr.rel (0) target = $region49
    $region48: #{tpu_custom_call.1} parent=1 // pred_region
      %91 = dma.done [#allocation10], 512
    $region49: #{tpu_custom_call.1} parent=1 // pred_fallthru
      _
    // Predicated region
    $region50: #{tpu_custom_call.1} parent=1 // pred_check
      _
    $region51: #{tpu_custom_call.1} parent=1 // pred_check_branch
      %93 = sbr.rel (0) target = $region53
    $region52: #{tpu_custom_call.1} parent=1 // pred_region
      %95 = dma.done [#allocation10], 512
    $region53: #{tpu_custom_call.1} parent=1 // pred_fallthru
      _
    // Predicated region
    $region54: #{tpu_custom_call.1} parent=1 // pred_check
      _
    $region55: #{tpu_custom_call.1} parent=1 // pred_check_branch
      %97 = sbr.rel (0) target = $region57
    $region56: #{tpu_custom_call.1} parent=1 // pred_region
      %99 = dma.done [#allocation13], 128
    $region57: #{tpu_custom_call.1} parent=1 // pred_fallthru
      _
    %v101 = vld [vmem:[%s0] sm:$0xff]
    %v102 = vld [vmem:[%s0 + $0x8] sm:$0xff]
    %v103 = vpack.c.bf16 %v102, %v101
    %v104 = vld [vmem:[#allocation6] sm:$0xff]
    %v105 = vld [vmem:[#allocation6 + $0x8] sm:$0xff]
    %v106 = vld [vmem:[#allocation6 + $0x10] sm:$0xff]
    %v107 = vld [vmem:[#allocation6 + $0x18] sm:$0xff]
    %v108 = vpack.c.bf16 %v105, %v104
    %v109 = vpack.c.bf16 %v107, %v106
    %v110 = vld [vmem:[%s3] sm:$0x1]
    %v112 = vperm.slane %v110, 0
    %vm114 = vcmask 261120
    %v116 = vsel %vm114, %v103, 0
    %118 = vmatpush.bf16.msra.mxu0 0
    %119 = vmatpush.bf16.msra.mxu0 0
    %120 = vmatpush.bf16.msra.mxu0 0
    %121 = vmatpush.bf16.msra.mxu0 0
    %122 = vmatpush.bf16.msra.mxu0 0
    %123 = vmatpush.bf16.msra.mxu0 0
    %124 = vmatpush.bf16.msra.mxu0 %v109
    %125 = vmatpush.bf16.msra.mxu0 %v108
    %126 = vmatmul.bf16.gmra.mxu0 %v116
    %v127 = vpop.f32.mrf.mxu0
    %v128 = vadd.f32 %v112, %v127
    %v129 = vpop.f32.mrf.mxu0
    %v130 = vadd.f32 %v112, %v129
    %131 = vdwg.mxu0
    %132 = vst [vmem:[#allocation2] sm:$0xff] %v128
    %133 = vst [vmem:[#allocation2 + $0x8] sm:$0xff] %v130
    %v134 = vld [vmem:[#allocation9] sm:$0xff]
    %v135 = vld [vmem:[#allocation9 + $0x8] sm:$0xff]
    %v136 = vld [vmem:[#allocation9 + $0x10] sm:$0xff]
    %v137 = vld [vmem:[#allocation9 + $0x18] sm:$0xff]
    %v138 = vpack.c.bf16 %v135, %v134
    %v139 = vpack.c.bf16 %v137, %v136
    %v140 = vlaneseq
    %v141 = vand.u32 %v140, 127
    %vm142 = vcmp.lt.s32.totalorder %v141, 0
    %v143 = vsub.s32 0, %v141
    %v144 = vsel %vm142, %v143, %v141
    %v145 = vshrl.u32 %v144, 5
    %v146 = vand.u32 %v144, 31
    %v147 = vsub.s32 0, %v146
    %v148 = vsel %vm142, %v147, %v146
    %vm149 = vcmp.ne.s32.totalorder %v148, 0
    %vm150 = vcmp.lt.s32.totalorder %v148, 0
    %vm151 = vmand %vm150, %vm149
    %v152 = vadd.s32 %v148, 32
    %v153 = vsel %vm151, %v152, %v148
    %vm154 = vcmp.lt.s32.totalorder %v153, 16
    %v155 = vld [vmem:[#allocation2] sm:$0xff]
    %s156 = scalar_lea.vmem [#allocation2], 8
    %v157 = vld [vmem:[%s156] sm:$0xff]
    %v158 = vsel %vm154, %v155, %v157
    %v160 = vsel %vm114, 0, 0
    %162 = vmatpush.bf16.msra.mxu0 0
    %163 = vmatpush.bf16.msra.mxu0 0
    %164 = vmatpush.bf16.msra.mxu0 0
    %165 = vmatpush.bf16.msra.mxu0 0
    %166 = vmatpush.bf16.msra.mxu0 0
    %167 = vmatpush.bf16.msra.mxu0 0
    %168 = vmatpush.bf16.msra.mxu0 %v139
    %169 = vmatpush.bf16.msra.mxu0 %v138
    %170 = vmatmul.bf16.gmra.mxu0 %v160
    %v171 = vpop.f32.mrf.mxu0
    %v172 = vadd.f32 0.0, %v171
    %v173 = vpop.f32.mrf.mxu0
    %174 = vdwg.mxu0
    %v175 = vadd.f32 %v158, %v172
    %v176 = vxor.u32 %v175, 2147483648
    %v177 = vmul.f32 %v176, 1.442695
    %v178 = vpow.pop %v177
    %v179 = vadd.f32 %v178, 1.0
    %v180 = vrcp.pop %v179
    %v181 = vmul.f32 %v179, %v180
    %v182 = vsub.f32 1.0, %v181
    %v183 = vmul.f32 %v180, %v182
    %v184 = vadd.f32 %v180, %v183
    %vm185 = vweird.f32 %v179
    %vm186 = vweird.f32 %v180
    %vm187 = vmor %vm185, %vm186
    %v188 = vsel %vm187, %v180, %v184
    %v189 = vand.u32 2147483647, %v179
    %vm190 = vcmp.eq.f32.partialorder %v189, 8.507059e+37
    %v191 = vand.u32 %v179, 2147483648
    %v192 = vor.u32 1.1754944e-38, %v191
    %v193 = vsel %vm190, %v192, %v188
    %v194 = vmul.f32 1.0, %v193
    %v195 = vtanh.pop %v175
    %v196 = vmul.f32 %v194, 0.0
    %198 = vrot.lane.b32.xlu0 %v195, 64
    %v199 = vpop.permute.xlu0 %198
    %v201 = vmul.f32 %v194, %v199
    %203 = vrot.lane.b32.xlu0 %v201, 32
    %v204 = vpop.permute.xlu0 %203
    %v206 = vadd.f32 %v196, %v204
    %v207 = vtanh.pop %v206
    %209 = vrot.lane.b32.xlu0 %v207, 64
    %v210 = vpop.permute.xlu0 %209
    %v212 = vmul.f32 %v194, %v210
    %214 = vrot.lane.b32.xlu0 %v212, 32
    %v215 = vpop.permute.xlu0 %214
    %vm217 = vcmask 130048
    %218 = vst.msk [vmem:[#allocation3] sm:$0xff] %vm217, %v215
    %219 = vrot.lane.b32.xlu0 %v212, 16
    %v220 = vpop.permute.xlu0 %219
    %s222 = scalar_lea.vmem [#allocation4], 8
    %223 = vst.msk [vmem:[%s222] sm:$0xff] %vm217, %v220
    %v224 = vld [vmem:[%s156] sm:$0xff]
    %v225 = vld [vmem:[#allocation2] sm:$0xff]
    %v226 = vsel %vm154, %v224, %v225
    %v227 = vpack.c.bf16 %v212, %v212
    %229 = vrot.lane.b32.xlu0 %v227, 32
    %v230 = vpop.permute.xlu0 %229
    %v232 = vsel %vm114, %v230, 0
    %234 = vmatpush.bf16.msra.mxu0 0
    %235 = vmatpush.bf16.msra.mxu0 0
    %236 = vmatpush.bf16.msra.mxu0 0
    %237 = vmatpush.bf16.msra.mxu0 0
    %238 = vmatpush.bf16.msra.mxu0 0
    %239 = vmatpush.bf16.msra.mxu0 0
    %240 = vmatpush.bf16.msra.mxu0 %v139
    %241 = vmatpush.bf16.msra.mxu0 %v138
    %242 = vmatmul.bf16.gmra.mxu0 %v232
    %v243 = vpop.f32.mrf.mxu0
    %v244 = vadd.f32 0.0, %v243
    %v245 = vpop.f32.mrf.mxu0
    %246 = vdwg.mxu0
    %v247 = vadd.f32 %v226, %v244
    %v248 = vxor.u32 %v247, 2147483648
    %v249 = vmul.f32 %v248, 1.442695
    %v250 = vpow.pop %v249
    %v251 = vadd.f32 %v250, 1.0
    %v252 = vrcp.pop %v251
    %v253 = vmul.f32 %v251, %v252
    %v254 = vsub.f32 1.0, %v253
    %v255 = vmul.f32 %v252, %v254
    %v256 = vadd.f32 %v252, %v255
    %vm257 = vweird.f32 %v251
    %vm258 = vweird.f32 %v252
    %vm259 = vmor %vm257, %vm258
    %v260 = vsel %vm259, %v252, %v256
    %v261 = vand.u32 2147483647, %v251
    %vm262 = vcmp.eq.f32.partialorder %v261, 8.507059e+37
    %v263 = vand.u32 %v251, 2147483648
    %v264 = vor.u32 1.1754944e-38, %v263
    %v265 = vsel %vm262, %v264, %v260
    %v266 = vmul.f32 1.0, %v265
    %v267 = vtanh.pop %v247
    %v268 = vmul.f32 %v266, %v206
    %270 = vrot.lane.b32.xlu0 %v267, 64
    %v271 = vpop.permute.xlu0 %270
    %v273 = vmul.f32 %v266, %v271
    %275 = vrot.lane.b32.xlu0 %v273, 32
    %v276 = vpop.permute.xlu0 %275
    %v278 = vadd.f32 %v268, %v276
    %v279 = vtanh.pop %v278
    %281 = vrot.lane.b32.xlu0 %v279, 64
    %v282 = vpop.permute.xlu0 %281
    %v284 = vmul.f32 %v266, %v282
    %286 = vrot.lane.b32.xlu0 %v284, 32
    %v287 = vpop.permute.xlu0 %286
    %s289 = scalar_lea.vmem [#allocation3], 8
    %290 = vst.msk [vmem:[%s289] sm:$0xff] %vm217, %v287
    %291 = vrot.lane.b32.xlu0 %v284, 16
    %v292 = vpop.permute.xlu0 %291
    %294 = vst.msk [vmem:[#allocation4] sm:$0xff] %vm217, %v292
    %v295 = vld [vmem:[#allocation3] sm:$0xff]
    %v296 = vld [vmem:[#allocation3 + $0x8] sm:$0xff]
    %v297 = vpack.c.bf16 %v296, %v295
    %v298 = vld [vmem:[#allocation4] sm:$0xff]
    %v299 = vld [vmem:[#allocation4 + $0x8] sm:$0xff]
    %v300 = vpack.c.bf16 %v299, %v298
    %v301 = vld [vmem:[#allocation11] sm:$0xff]
    %v302 = vld [vmem:[#allocation11 + $0x8] sm:$0xff]
    %v303 = vpack.c.bf16 %v302, %v301
    %v304 = vld [vmem:[#allocation11 + $0x10] sm:$0xff]
    %v305 = vld [vmem:[#allocation11 + $0x18] sm:$0xff]
    %v306 = vpack.c.bf16 %v305, %v304
    %v308 = vsel %vm217, %v300, 0
    %310 = vmatpush.bf16.msra.mxu0 0
    %311 = vmatpush.bf16.msra.mxu0 0
    %312 = vmatpush.bf16.msra.mxu0 0
    %313 = vmatpush.bf16.msra.mxu0 0
    %314 = vmatpush.bf16.msra.mxu0 0
    %315 = vmatpush.bf16.msra.mxu0 0
    %316 = vmatpush.bf16.msra.mxu0 0
    %317 = vmatpush.bf16.msra.mxu0 %v306
    %318 = vmatmul.bf16.gmra.mxu0 %v308
    %v319 = vpop.f32.mrf.mxu0
    %v320 = vadd.f32 0.0, %v319
    %v321 = vpop.f32.mrf.mxu0
    %v322 = vadd.f32 0.0, %v321
    %323 = vdwg.mxu0
    %v325 = vsel %vm217, %v297, 0
    %327 = vmatpush.bf16.msra.mxu0 0
    %328 = vmatpush.bf16.msra.mxu0 0
    %329 = vmatpush.bf16.msra.mxu0 0
    %330 = vmatpush.bf16.msra.mxu0 0
    %331 = vmatpush.bf16.msra.mxu0 0
    %332 = vmatpush.bf16.msra.mxu0 0
    %333 = vmatpush.bf16.msra.mxu0 0
    %334 = vmatpush.bf16.msra.mxu0 %v303
    %335 = vmatmul.bf16.gmra.mxu0 %v325
    %v336 = vpop.f32.mrf.mxu0
    %v337 = vadd.f32 %v320, %v336
    %v338 = vpop.f32.mrf.mxu0
    %v339 = vadd.f32 %v322, %v338
    %340 = vdwg.mxu0
    %v341 = vld [vmem:[%s5] sm:$0x1]
    %v343 = vperm.slane %v341, 0
    %v345 = vadd.f32 %v337, %v343
    %v346 = vadd.f32 %v339, %v343
    %347 = vst [vmem:[#allocation5] sm:$0xff] %v345
    %348 = vst [vmem:[#allocation5 + $0x8] sm:$0xff] %v346
    %v349 = vld [vmem:[#allocation12] sm:$0xff]
    %v350 = vlaneseq
    %v351 = vshrl.u32 %v350, 7
    %v352 = vld [vmem:[%s7] sm:$0x1]
    %v353 = vld [vmem:[#allocation5] sm:$0x1]
    %v354 = vld [vmem:[#allocation5 + $0x8] sm:$0x1]
    %v356 = vrot.slane %v354, 7
    %vm358 = vcmask 1040384
    %v359 = vsel %vm358, %v353, %v356
    %v361 = vperm.slane %v352, 0
    %v363 = vadd.f32 %v361, %v359
    %364 = vst [vmem:[#allocation15] sm:$0x3] 0
    %v365 = vperm.slane %v363, 0
    %v366 = vlaneseq
    %v367 = vshrl.u32 %v366, 7
    %369 = vset.pattern.permute.xlu0 %v367
    %370 = vperm.xlu0 %369, %v365
    %v371 = vpop.permute.xlu0 %370
    %v372 = vperm.slane %v363, 1
    %v373 = vlaneseq
    %v374 = vshrl.u32 %v373, 7
    %376 = vset.pattern.permute.xlu0 %v374
    %377 = vperm.xlu0 %376, %v372
    %v378 = vpop.permute.xlu0 %377
    %v379 = vadd.f32 %v371, %v349
    %v380 = vadd.f32 %v378, %v349
    %v381 = vrot.slane %v379, 4
    %v382 = vmax.f32 %v379, %v381
    %v383 = vrot.slane %v382, 2
    %v384 = vmax.f32 %v382, %v383
    %v385 = vrot.slane %v384, 1
    %v386 = vmax.f32 %v384, %v385
    %v387 = vrot.slane %v380, 4
    %v388 = vmax.f32 %v380, %v387
    %v389 = vrot.slane %v388, 2
    %v390 = vmax.f32 %v388, %v389
    %v391 = vrot.slane %v390, 1
    %v392 = vmax.f32 %v390, %v391
    %vm393 = vcmp.eq.f32.partialorder %v379, %v386
    %vm394 = vcmp.eq.f32.partialorder %v380, %v392
    %v395 = vsel %vm393, %v351, 8
    %v396 = vsel %vm394, %v351, 8
    %v397 = vrot.slane %v395, 4
    %vm398 = vcmp.lt.s32.totalorder %v395, %v397
    %v399 = vsel %vm398, %v395, %v397
    %v400 = vrot.slane %v399, 2
    %vm401 = vcmp.lt.s32.totalorder %v399, %v400
    %v402 = vsel %vm401, %v399, %v400
    %v403 = vrot.slane %v402, 1
    %vm404 = vcmp.lt.s32.totalorder %v402, %v403
    %v405 = vsel %vm404, %v402, %v403
    %v406 = vrot.slane %v396, 4
    %vm407 = vcmp.lt.s32.totalorder %v396, %v406
    %v408 = vsel %vm407, %v396, %v406
    %v409 = vrot.slane %v408, 2
    %vm410 = vcmp.lt.s32.totalorder %v408, %v409
    %v411 = vsel %vm410, %v408, %v409
    %v412 = vrot.slane %v411, 1
    %vm413 = vcmp.lt.s32.totalorder %v411, %v412
    %v414 = vsel %vm413, %v411, %v412
    %v415 = vld [vmem:[#allocation5 + $0x1] sm:$0x1]
    %v416 = vld [vmem:[#allocation5 + $0x9] sm:$0x1]
    %v418 = vrot.slane %v416, 7
    %v420 = vsel %vm358, %v415, %v418
    %v422 = vrot.slane %v420, 1
    %v425 = vadd.f32 %v386, %v420
    %v426 = vadd.f32 %v392, %v422
    %s427 = scalar_lea.vmem %s6, 2
    %v428 = vld [vmem:[%s427] sm:$0x3]
    %vm429 = vcmp.gt.f32.partialorder %v428, 0.5
    %vm430 = vcmask 1041409
    %v431 = vsel %vm430, %v414, %v405
    %s432 = scalar_lea.vmem [#allocation15], 2
    %433 = vst [vmem:[%s432] sm:$0x3] %v431
    %v434 = vsel %vm429, 1, 0
    %435 = vset.pattern.permute.xlu0 0
    %436 = vperm.xlu0 %435, %v434
    %v437 = vpop.permute.xlu0 %436
    %vm438 = vcmp.eq.s32.totalorder %v437, 1
    %v441 = vrot.slane %v426, 7
    %v442 = vsel %vm430, %v441, %v425
    %v444 = vsel %vm438, %v442, %v363
    %v445 = vperm.slane %v444, 0
    %v446 = vlaneseq
    %v447 = vshrl.u32 %v446, 7
    %449 = vset.pattern.permute.xlu0 %v447
    %450 = vperm.xlu0 %449, %v445
    %v451 = vpop.permute.xlu0 %450
    %v452 = vperm.slane %v444, 1
    %v453 = vlaneseq
    %v454 = vshrl.u32 %v453, 7
    %456 = vset.pattern.permute.xlu0 %v454
    %457 = vperm.xlu0 %456, %v452
    %v458 = vpop.permute.xlu0 %457
    %v459 = vadd.f32 %v451, %v349
    %v460 = vadd.f32 %v458, %v349
    %v461 = vrot.slane %v459, 4
    %v462 = vmax.f32 %v459, %v461
    %v463 = vrot.slane %v462, 2
    %v464 = vmax.f32 %v462, %v463
    %v465 = vrot.slane %v464, 1
    %v466 = vmax.f32 %v464, %v465
    %v467 = vrot.slane %v460, 4
    %v468 = vmax.f32 %v460, %v467
    %v469 = vrot.slane %v468, 2
    %v470 = vmax.f32 %v468, %v469
    %v471 = vrot.slane %v470, 1
    %v472 = vmax.f32 %v470, %v471
    %vm473 = vcmp.eq.f32.partialorder %v459, %v466
    %vm474 = vcmp.eq.f32.partialorder %v460, %v472
    %v475 = vsel %vm473, %v351, 8
    %v476 = vsel %vm474, %v351, 8
    %v477 = vrot.slane %v475, 4
    %vm478 = vcmp.lt.s32.totalorder %v475, %v477
    %v479 = vsel %vm478, %v475, %v477
    %v480 = vrot.slane %v479, 2
    %vm481 = vcmp.lt.s32.totalorder %v479, %v480
    %v482 = vsel %vm481, %v479, %v480
    %v483 = vrot.slane %v482, 1
    %vm484 = vcmp.lt.s32.totalorder %v482, %v483
    %v485 = vsel %vm484, %v482, %v483
    %v486 = vrot.slane %v476, 4
    %vm487 = vcmp.lt.s32.totalorder %v476, %v486
    %v488 = vsel %vm487, %v476, %v486
    %v489 = vrot.slane %v488, 2
    %vm490 = vcmp.lt.s32.totalorder %v488, %v489
    %v491 = vsel %vm490, %v488, %v489
    %v492 = vrot.slane %v491, 1
    %vm493 = vcmp.lt.s32.totalorder %v491, %v492
    %v494 = vsel %vm493, %v491, %v492
    %v495 = vld [vmem:[#allocation5 + $0x2] sm:$0x1]
    %v496 = vld [vmem:[#allocation5 + $0xa] sm:$0x1]
    %v498 = vrot.slane %v496, 7
    %v500 = vsel %vm358, %v495, %v498
    %v502 = vrot.slane %v500, 1
    %v505 = vadd.f32 %v466, %v500
    %v506 = vadd.f32 %v472, %v502
    %s507 = scalar_lea.vmem %s6, 4
    %v508 = vld [vmem:[%s507] sm:$0x3]
    %vm509 = vcmp.gt.f32.partialorder %v508, 0.5
    %v510 = vsel %vm430, %v494, %v485
    %s511 = scalar_lea.vmem [#allocation15], 4
    %512 = vst [vmem:[%s511] sm:$0x3] %v510
    %v513 = vsel %vm509, 1, 0
    %514 = vset.pattern.permute.xlu0 0
    %515 = vperm.xlu0 %514, %v513
    %v516 = vpop.permute.xlu0 %515
    %vm517 = vcmp.eq.s32.totalorder %v516, 1
    %v520 = vrot.slane %v506, 7
    %v521 = vsel %vm430, %v520, %v505
    %v523 = vsel %vm517, %v521, %v444
    %v524 = vperm.slane %v523, 0
    %v525 = vlaneseq
    %v526 = vshrl.u32 %v525, 7
    %528 = vset.pattern.permute.xlu0 %v526
    %529 = vperm.xlu0 %528, %v524
    %v530 = vpop.permute.xlu0 %529
    %v531 = vperm.slane %v523, 1
    %v532 = vlaneseq
    %v533 = vshrl.u32 %v532, 7
    %535 = vset.pattern.permute.xlu0 %v533
    %536 = vperm.xlu0 %535, %v531
    %v537 = vpop.permute.xlu0 %536
    %v538 = vadd.f32 %v530, %v349
    %v539 = vadd.f32 %v537, %v349
    %v540 = vrot.slane %v538, 4
    %v541 = vmax.f32 %v538, %v540
    %v542 = vrot.slane %v541, 2
    %v543 = vmax.f32 %v541, %v542
    %v544 = vrot.slane %v543, 1
    %v545 = vmax.f32 %v543, %v544
    %v546 = vrot.slane %v539, 4
    %v547 = vmax.f32 %v539, %v546
    %v548 = vrot.slane %v547, 2
    %v549 = vmax.f32 %v547, %v548
    %v550 = vrot.slane %v549, 1
    %v551 = vmax.f32 %v549, %v550
    %vm552 = vcmp.eq.f32.partialorder %v538, %v545
    %vm553 = vcmp.eq.f32.partialorder %v539, %v551
    %v554 = vsel %vm552, %v351, 8
    %v555 = vsel %vm553, %v351, 8
    %v556 = vrot.slane %v554, 4
    %vm557 = vcmp.lt.s32.totalorder %v554, %v556
    %v558 = vsel %vm557, %v554, %v556
    %v559 = vrot.slane %v558, 2
    %vm560 = vcmp.lt.s32.totalorder %v558, %v559
    %v561 = vsel %vm560, %v558, %v559
    %v562 = vrot.slane %v561, 1
    %vm563 = vcmp.lt.s32.totalorder %v561, %v562
    %v564 = vsel %vm563, %v561, %v562
    %v565 = vrot.slane %v555, 4
    %vm566 = vcmp.lt.s32.totalorder %v555, %v565
    %v567 = vsel %vm566, %v555, %v565
    %v568 = vrot.slane %v567, 2
    %vm569 = vcmp.lt.s32.totalorder %v567, %v568
    %v570 = vsel %vm569, %v567, %v568
    %v571 = vrot.slane %v570, 1
    %vm572 = vcmp.lt.s32.totalorder %v570, %v571
    %v573 = vsel %vm572, %v570, %v571
    %v574 = vld [vmem:[#allocation5 + $0x3] sm:$0x1]
    %v575 = vld [vmem:[#allocation5 + $0xb] sm:$0x1]
    %v577 = vrot.slane %v575, 7
    %v579 = vsel %vm358, %v574, %v577
    %v581 = vrot.slane %v579, 1
    %v584 = vadd.f32 %v545, %v579
    %v585 = vadd.f32 %v551, %v581
    %s586 = scalar_lea.vmem %s6, 6
    %v587 = vld [vmem:[%s586] sm:$0x3]
    %vm588 = vcmp.gt.f32.partialorder %v587, 0.5
    %v589 = vsel %vm430, %v573, %v564
    %s590 = scalar_lea.vmem [#allocation15], 6
    %591 = vst [vmem:[%s590] sm:$0x3] %v589
    %v592 = vsel %vm588, 1, 0
    %593 = vset.pattern.permute.xlu0 0
    %594 = vperm.xlu0 %593, %v592
    %v595 = vpop.permute.xlu0 %594
    %vm596 = vcmp.eq.s32.totalorder %v595, 1
    %v599 = vrot.slane %v585, 7
    %v600 = vsel %vm430, %v599, %v584
    %v602 = vsel %vm596, %v600, %v523
    %v603 = vperm.slane %v602, 0
    %v604 = vlaneseq
    %v605 = vshrl.u32 %v604, 7
    %607 = vset.pattern.permute.xlu0 %v605
    %608 = vperm.xlu0 %607, %v603
    %v609 = vpop.permute.xlu0 %608
    %v610 = vperm.slane %v602, 1
    %v611 = vlaneseq
    %v612 = vshrl.u32 %v611, 7
    %614 = vset.pattern.permute.xlu0 %v612
    %615 = vperm.xlu0 %614, %v610
    %v616 = vpop.permute.xlu0 %615
    %v617 = vadd.f32 %v609, %v349
    %v618 = vadd.f32 %v616, %v349
    %v619 = vrot.slane %v617, 4
    %v620 = vmax.f32 %v617, %v619
    %v621 = vrot.slane %v620, 2
    %v622 = vmax.f32 %v620, %v621
    %v623 = vrot.slane %v622, 1
    %v624 = vmax.f32 %v622, %v623
    %v625 = vrot.slane %v618, 4
    %v626 = vmax.f32 %v618, %v625
    %v627 = vrot.slane %v626, 2
    %v628 = vmax.f32 %v626, %v627
    %v629 = vrot.slane %v628, 1
    %v630 = vmax.f32 %v628, %v629
    %vm631 = vcmp.eq.f32.partialorder %v617, %v624
    %vm632 = vcmp.eq.f32.partialorder %v618, %v630
    %v633 = vsel %vm631, %v351, 8
    %v634 = vsel %vm632, %v351, 8
    %v635 = vrot.slane %v633, 4
    %vm636 = vcmp.lt.s32.totalorder %v633, %v635
    %v637 = vsel %vm636, %v633, %v635
    %v638 = vrot.slane %v637, 2
    %vm639 = vcmp.lt.s32.totalorder %v637, %v638
    %v640 = vsel %vm639, %v637, %v638
    %v641 = vrot.slane %v640, 1
    %vm642 = vcmp.lt.s32.totalorder %v640, %v641
    %v643 = vsel %vm642, %v640, %v641
    %v644 = vrot.slane %v634, 4
    %vm645 = vcmp.lt.s32.totalorder %v634, %v644
    %v646 = vsel %vm645, %v634, %v644
    %v647 = vrot.slane %v646, 2
    %vm648 = vcmp.lt.s32.totalorder %v646, %v647
    %v649 = vsel %vm648, %v646, %v647
    %v650 = vrot.slane %v649, 1
    %vm651 = vcmp.lt.s32.totalorder %v649, %v650
    %v652 = vsel %vm651, %v649, %v650
    %v653 = vld [vmem:[#allocation5 + $0x4] sm:$0x1]
    %v654 = vld [vmem:[#allocation5 + $0xc] sm:$0x1]
    %v656 = vrot.slane %v654, 7
    %v658 = vsel %vm358, %v653, %v656
    %v660 = vrot.slane %v658, 1
    %v663 = vadd.f32 %v624, %v658
    %v664 = vadd.f32 %v630, %v660
    %s665 = scalar_lea.vmem %s6, 8
    %v666 = vld [vmem:[%s665] sm:$0x3]
    %vm667 = vcmp.gt.f32.partialorder %v666, 0.5
    %v668 = vsel %vm430, %v652, %v643
    %s669 = scalar_lea.vmem [#allocation15], 8
    %670 = vst [vmem:[%s669] sm:$0x3] %v668
    %v671 = vsel %vm667, 1, 0
    %672 = vset.pattern.permute.xlu0 0
    %673 = vperm.xlu0 %672, %v671
    %v674 = vpop.permute.xlu0 %673
    %vm675 = vcmp.eq.s32.totalorder %v674, 1
    %v678 = vrot.slane %v664, 7
    %v679 = vsel %vm430, %v678, %v663
    %v681 = vsel %vm675, %v679, %v602
    %v682 = vperm.slane %v681, 0
    %v683 = vlaneseq
    %v684 = vshrl.u32 %v683, 7
    %686 = vset.pattern.permute.xlu0 %v684
    %687 = vperm.xlu0 %686, %v682
    %v688 = vpop.permute.xlu0 %687
    %v689 = vperm.slane %v681, 1
    %v690 = vlaneseq
    %v691 = vshrl.u32 %v690, 7
    %693 = vset.pattern.permute.xlu0 %v691
    %694 = vperm.xlu0 %693, %v689
    %v695 = vpop.permute.xlu0 %694
    %v696 = vadd.f32 %v688, %v349
    %v697 = vadd.f32 %v695, %v349
    %v698 = vrot.slane %v696, 4
    %v699 = vmax.f32 %v696, %v698
    %v700 = vrot.slane %v699, 2
    %v701 = vmax.f32 %v699, %v700
    %v702 = vrot.slane %v701, 1
    %v703 = vmax.f32 %v701, %v702
    %v704 = vrot.slane %v697, 4
    %v705 = vmax.f32 %v697, %v704
    %v706 = vrot.slane %v705, 2
    %v707 = vmax.f32 %v705, %v706
    %v708 = vrot.slane %v707, 1
    %v709 = vmax.f32 %v707, %v708
    %vm710 = vcmp.eq.f32.partialorder %v696, %v703
    %vm711 = vcmp.eq.f32.partialorder %v697, %v709
    %v712 = vsel %vm710, %v351, 8
    %v713 = vsel %vm711, %v351, 8
    %v714 = vrot.slane %v712, 4
    %vm715 = vcmp.lt.s32.totalorder %v712, %v714
    %v716 = vsel %vm715, %v712, %v714
    %v717 = vrot.slane %v716, 2
    %vm718 = vcmp.lt.s32.totalorder %v716, %v717
    %v719 = vsel %vm718, %v716, %v717
    %v720 = vrot.slane %v719, 1
    %vm721 = vcmp.lt.s32.totalorder %v719, %v720
    %v722 = vsel %vm721, %v719, %v720
    %v723 = vrot.slane %v713, 4
    %vm724 = vcmp.lt.s32.totalorder %v713, %v723
    %v725 = vsel %vm724, %v713, %v723
    %v726 = vrot.slane %v725, 2
    %vm727 = vcmp.lt.s32.totalorder %v725, %v726
    %v728 = vsel %vm727, %v725, %v726
    %v729 = vrot.slane %v728, 1
    %vm730 = vcmp.lt.s32.totalorder %v728, %v729
    %v731 = vsel %vm730, %v728, %v729
    %v732 = vld [vmem:[#allocation5 + $0x5] sm:$0x1]
    %v733 = vld [vmem:[#allocation5 + $0xd] sm:$0x1]
    %v735 = vrot.slane %v733, 7
    %v737 = vsel %vm358, %v732, %v735
    %v739 = vrot.slane %v737, 1
    %v742 = vadd.f32 %v703, %v737
    %v743 = vadd.f32 %v709, %v739
    %s744 = scalar_lea.vmem %s6, 10
    %v745 = vld [vmem:[%s744] sm:$0x3]
    %vm746 = vcmp.gt.f32.partialorder %v745, 0.5
    %v747 = vsel %vm430, %v731, %v722
    %s748 = scalar_lea.vmem [#allocation15], 10
    %749 = vst [vmem:[%s748] sm:$0x3] %v747
    %v750 = vsel %vm746, 1, 0
    %751 = vset.pattern.permute.xlu0 0
    %752 = vperm.xlu0 %751, %v750
    %v753 = vpop.permute.xlu0 %752
    %vm754 = vcmp.eq.s32.totalorder %v753, 1
    %v757 = vrot.slane %v743, 7
    %v758 = vsel %vm430, %v757, %v742
    %v760 = vsel %vm754, %v758, %v681
    %v761 = vperm.slane %v760, 0
    %v762 = vlaneseq
    %v763 = vshrl.u32 %v762, 7
    %765 = vset.pattern.permute.xlu0 %v763
    %766 = vperm.xlu0 %765, %v761
    %v767 = vpop.permute.xlu0 %766
    %v768 = vperm.slane %v760, 1
    %v769 = vlaneseq
    %v770 = vshrl.u32 %v769, 7
    %772 = vset.pattern.permute.xlu0 %v770
    %773 = vperm.xlu0 %772, %v768
    %v774 = vpop.permute.xlu0 %773
    %v775 = vadd.f32 %v767, %v349
    %v776 = vadd.f32 %v774, %v349
    %v777 = vrot.slane %v775, 4
    %v778 = vmax.f32 %v775, %v777
    %v779 = vrot.slane %v778, 2
    %v780 = vmax.f32 %v778, %v779
    %v781 = vrot.slane %v780, 1
    %v782 = vmax.f32 %v780, %v781
    %v783 = vrot.slane %v776, 4
    %v784 = vmax.f32 %v776, %v783
    %v785 = vrot.slane %v784, 2
    %v786 = vmax.f32 %v784, %v785
    %v787 = vrot.slane %v786, 1
    %v788 = vmax.f32 %v786, %v787
    %vm789 = vcmp.eq.f32.partialorder %v775, %v782
    %vm790 = vcmp.eq.f32.partialorder %v776, %v788
    %v791 = vsel %vm789, %v351, 8
    %v792 = vsel %vm790, %v351, 8
    %v793 = vrot.slane %v791, 4
    %vm794 = vcmp.lt.s32.totalorder %v791, %v793
    %v795 = vsel %vm794, %v791, %v793
    %v796 = vrot.slane %v795, 2
    %vm797 = vcmp.lt.s32.totalorder %v795, %v796
    %v798 = vsel %vm797, %v795, %v796
    %v799 = vrot.slane %v798, 1
    %vm800 = vcmp.lt.s32.totalorder %v798, %v799
    %v801 = vsel %vm800, %v798, %v799
    %v802 = vrot.slane %v792, 4
    %vm803 = vcmp.lt.s32.totalorder %v792, %v802
    %v804 = vsel %vm803, %v792, %v802
    %v805 = vrot.slane %v804, 2
    %vm806 = vcmp.lt.s32.totalorder %v804, %v805
    %v807 = vsel %vm806, %v804, %v805
    %v808 = vrot.slane %v807, 1
    %vm809 = vcmp.lt.s32.totalorder %v807, %v808
    %v810 = vsel %vm809, %v807, %v808
    %v811 = vld [vmem:[#allocation5 + $0x6] sm:$0x1]
    %v812 = vld [vmem:[#allocation5 + $0xe] sm:$0x1]
    %v814 = vrot.slane %v812, 7
    %v816 = vsel %vm358, %v811, %v814
    %v818 = vrot.slane %v816, 1
    %v821 = vadd.f32 %v782, %v816
    %v822 = vadd.f32 %v788, %v818
    %s823 = scalar_lea.vmem %s6, 12
    %v824 = vld [vmem:[%s823] sm:$0x3]
    %vm825 = vcmp.gt.f32.partialorder %v824, 0.5
    %v826 = vsel %vm430, %v810, %v801
    %s827 = scalar_lea.vmem [#allocation15], 12
    %828 = vst [vmem:[%s827] sm:$0x3] %v826
    %v829 = vsel %vm825, 1, 0
    %830 = vset.pattern.permute.xlu0 0
    %831 = vperm.xlu0 %830, %v829
    %v832 = vpop.permute.xlu0 %831
    %vm833 = vcmp.eq.s32.totalorder %v832, 1
    %v836 = vrot.slane %v822, 7
    %v837 = vsel %vm430, %v836, %v821
    %v839 = vsel %vm833, %v837, %v760
    %v840 = vperm.slane %v839, 0
    %v841 = vlaneseq
    %v842 = vshrl.u32 %v841, 7
    %844 = vset.pattern.permute.xlu0 %v842
    %845 = vperm.xlu0 %844, %v840
    %v846 = vpop.permute.xlu0 %845
    %v847 = vperm.slane %v839, 1
    %v848 = vlaneseq
    %v849 = vshrl.u32 %v848, 7
    %851 = vset.pattern.permute.xlu0 %v849
    %852 = vperm.xlu0 %851, %v847
    %v853 = vpop.permute.xlu0 %852
    %v854 = vadd.f32 %v846, %v349
    %v855 = vadd.f32 %v853, %v349
    %v856 = vrot.slane %v854, 4
    %v857 = vmax.f32 %v854, %v856
    %v858 = vrot.slane %v857, 2
    %v859 = vmax.f32 %v857, %v858
    %v860 = vrot.slane %v859, 1
    %v861 = vmax.f32 %v859, %v860
    %v862 = vrot.slane %v855, 4
    %v863 = vmax.f32 %v855, %v862
    %v864 = vrot.slane %v863, 2
    %v865 = vmax.f32 %v863, %v864
    %v866 = vrot.slane %v865, 1
    %v867 = vmax.f32 %v865, %v866
    %vm868 = vcmp.eq.f32.partialorder %v854, %v861
    %vm869 = vcmp.eq.f32.partialorder %v855, %v867
    %v870 = vsel %vm868, %v351, 8
    %v871 = vsel %vm869, %v351, 8
    %v872 = vrot.slane %v870, 4
    %vm873 = vcmp.lt.s32.totalorder %v870, %v872
    %v874 = vsel %vm873, %v870, %v872
    %v875 = vrot.slane %v874, 2
    %vm876 = vcmp.lt.s32.totalorder %v874, %v875
    %v877 = vsel %vm876, %v874, %v875
    %v878 = vrot.slane %v877, 1
    %vm879 = vcmp.lt.s32.totalorder %v877, %v878
    %v880 = vsel %vm879, %v877, %v878
    %v881 = vrot.slane %v871, 4
    %vm882 = vcmp.lt.s32.totalorder %v871, %v881
    %v883 = vsel %vm882, %v871, %v881
    %v884 = vrot.slane %v883, 2
    %vm885 = vcmp.lt.s32.totalorder %v883, %v884
    %v886 = vsel %vm885, %v883, %v884
    %v887 = vrot.slane %v886, 1
    %vm888 = vcmp.lt.s32.totalorder %v886, %v887
    %v889 = vsel %vm888, %v886, %v887
    %v890 = vld [vmem:[#allocation5 + $0x7] sm:$0x1]
    %v891 = vld [vmem:[#allocation5 + $0xf] sm:$0x1]
    %v893 = vrot.slane %v891, 7
    %v895 = vsel %vm358, %v890, %v893
    %v897 = vrot.slane %v895, 1
    %v900 = vadd.f32 %v861, %v895
    %v901 = vadd.f32 %v867, %v897
    %s902 = scalar_lea.vmem %s6, 14
    %v903 = vld [vmem:[%s902] sm:$0x3]
    %vm904 = vcmp.gt.f32.partialorder %v903, 0.5
    %v905 = vsel %vm430, %v889, %v880
    %s906 = scalar_lea.vmem [#allocation15], 14
    %907 = vst [vmem:[%s906] sm:$0x3] %v905
    %v908 = vsel %vm904, 1, 0
    %909 = vset.pattern.permute.xlu0 0
    %910 = vperm.xlu0 %909, %v908
    %v911 = vpop.permute.xlu0 %910
    %vm912 = vcmp.eq.s32.totalorder %v911, 1
    %v915 = vrot.slane %v901, 7
    %v916 = vsel %vm430, %v915, %v900
    %v918 = vsel %vm912, %v916, %v839
    %v919 = vld [vmem:[%s8] sm:$0x1]
    %v921 = vperm.slane %v919, 0
    %v923 = vadd.f32 %v918, %v921
    %924 = vst [vmem:[#allocation14] sm:$0x3] %v923
    // Predicated region
    $region58: #{tpu_custom_call.1} parent=1 // pred_check
      _
    $region59: #{tpu_custom_call.1} parent=1 // pred_check_branch
      %926 = sbr.rel (0) target = $region61
    $region60: #{tpu_custom_call.1} parent=1 // pred_region
      %928 = vsyncadd [#allocation8], 0
      %s930 = sshll.u32 [#allocation14], 4
      %s931 = int_to_ptr.vmem [resolvable:$true] %s930
      %s932 = sshll.u32 %s10, 4
      %s933 = int_to_ptr.hbm [resolvable:$true] %s932
      %935 = dma.vmem_to_hbm [thread:$0]  %s931, 32, %s933, [#allocation8]
    $region61: #{tpu_custom_call.1} parent=1 // pred_fallthru
      _
    // Predicated region
    $region62: #{tpu_custom_call.1} parent=1 // pred_check
      _
    $region63: #{tpu_custom_call.1} parent=1 // pred_check_branch
      %937 = sbr.rel (0) target = $region65
    $region64: #{tpu_custom_call.1} parent=1 // pred_region
      %939 = vsyncadd [#allocation16], 0
      %s940 = sshll.u32 [#allocation15], 4
      %s941 = int_to_ptr.vmem [resolvable:$true] %s940
      %s942 = sshll.u32 %s11, 4
      %s943 = int_to_ptr.hbm [resolvable:$true] %s942
      %948 = dma.vmem_to_hbm [thread:$0]  %s941, 256, %s943, [#allocation16], 32, 32, 2
    $region65: #{tpu_custom_call.1} parent=1 // pred_fallthru
      _
    // Predicated region
    $region66: #{tpu_custom_call.1} parent=1 // pred_check
      _
    $region67: #{tpu_custom_call.1} parent=1 // pred_check_branch
      %950 = sbr.rel (0) target = $region69
    $region68: #{tpu_custom_call.1} parent=1 // pred_region
      %952 = dma.done [#allocation8], 32
    $region69: #{tpu_custom_call.1} parent=1 // pred_fallthru
      _
    // Predicated region
    $region70: #{tpu_custom_call.1} parent=1 // pred_check
      _
    $region71: #{tpu_custom_call.1} parent=1 // pred_check_branch
      %954 = sbr.rel (0) target = $region73
    $region72: #{tpu_custom_call.1} parent=1 // pred_region
      %956 = dma.done [#allocation16], 256
    $region73: #{tpu_custom_call.1} parent=1 // pred_fallthru
      _
    %957 = vsyncpa [#allocation7], 1
    %958 = vsyncpa [#allocation10], 1
    %959 = vsyncpa [#allocation13], 1
    %960 = vsyncpa [#allocation8], 1
    %961 = vsyncpa [#allocation16], 1

</llo_original>
